<compile_context>
chip_gen: v6e
topology: v6e:2x2x1
jax: 0.10.0
libtpu: 0.0.40
codegen_flags: <defaults>
</compile_context>

<pallas_src>
import functools

import jax
import jax.numpy as jnp
from jax import lax
from jax.experimental import pallas as pl
from jax.experimental.pallas import tpu as pltpu

_LANE = 128
_VMEM_LIMIT = 32 * 1024 * 1024  # raise v5e's 16 MiB scoped default; safe on v6e/v7x


def _round_up(x: int, m: int) -> int:
    return ((x + m - 1) // m) * m


def _effective_tile(requested: int, dim: int) -> int:
    """Clamp a requested tile to a 128-multiple no larger than the padded dim."""
    return max(_LANE, min(_round_up(requested, _LANE), _round_up(dim, _LANE)))


# ---------------------------------------------------------------------------
# K0: theta — Xw = X @ W + b, tiled over vertex rows (parallel).
# ---------------------------------------------------------------------------
def _theta_kernel(x_ref, w_ref, b_ref, xw_ref):
    xw = jnp.dot(x_ref[...], w_ref[...], preferred_element_type=jnp.float32)
    xw_ref[...] = (xw + b_ref[...]).astype(xw_ref.dtype)


# ---------------------------------------------------------------------------
# K1: v2e (mean) — Y = inv_de * (H^T @ Xw).
# grid = (E tiles ["parallel"], N tiles ["arbitrary" reduction]).
# ---------------------------------------------------------------------------
def _v2e_kernel(h_ref, xw_ref, inv_de_ref, y_ref, *scratch, multi_step: bool):
    # (TN, TE)^T @ (TN, C) -> (TE, C): contract H's dim 0 directly, no transposed copy.
    part = lax.dot_general(
        h_ref[...], xw_ref[...],
        dimension_numbers=(((0,), (0,)), ((), ())),
        preferred_element_type=jnp.float32)

    if not multi_step:                              # single reduction step: no scratch
        y_ref[...] = (part * inv_de_ref[...]).astype(y_ref.dtype)
        return

    acc_ref, = scratch
    k = pl.program_id(1)

    @pl.when(k == 0)
    def _():
        acc_ref[...] = jnp.zeros_like(acc_ref)

    acc_ref[...] += part

    @pl.when(k == pl.num_programs(1) - 1)
    def _():
        y_ref[...] = (acc_ref[...] * inv_de_ref[...]).astype(y_ref.dtype)


# ---------------------------------------------------------------------------
# K2: e2v (mean) + ReLU + Dropout — out = drop(relu(inv_dv * (H @ Y))).
# grid = (N tiles ["parallel"], E tiles ["arbitrary" reduction]).
# ---------------------------------------------------------------------------
def _e2v_kernel(h_ref, y_ref, inv_dv_ref, o_ref, *scratch,
                multi_step: bool, training: bool, drop_rate: float, seed: int):
    part = jnp.dot(h_ref[...], y_ref[...], preferred_element_type=jnp.float32)

    def finalize(acc):
        xv = jnp.maximum(acc * inv_dv_ref[...], 0.0)
        if training and drop_rate > 0.0:            # static Python branch
            if drop_rate >= 1.0:
                xv = jnp.zeros_like(xv)
            else:
                # Per-output-tile seed so dropout masks decorrelate across tiles.
                pltpu.prng_seed(seed + pl.program_id(0))
                bits = pltpu.bitcast(pltpu.prng_random_bits(xv.shape), jnp.uint32)
                thr = min(int(drop_rate * 4294967296.0), 4294967295)
                keep = bits >= jnp.uint32(thr)      # one compare + one select
                xv = jnp.where(keep, xv * jnp.float32(1.0 / (1.0 - drop_rate)), 0.0)
        o_ref[...] = xv.astype(o_ref.dtype)

    if not multi_step:                              # single reduction step: no scratch
        finalize(part)
        return

    acc_ref, = scratch
    k = pl.program_id(1)

    @pl.when(k == 0)
    def _():
        acc_ref[...] = jnp.zeros_like(acc_ref)

    acc_ref[...] += part

    @pl.when(k == pl.num_programs(1) - 1)
    def _():
        finalize(acc_ref[...])


@functools.partial(
    jax.jit,
    static_argnames=("training", "drop_rate", "seed", "tile_n", "tile_e"))
def hgnnp_conv(x, w, b, h, *, training=False, drop_rate=0.5, seed=0,
               tile_n=512, tile_e=512):
    """Fused HGNNPConv forward.

    x : (N, Cin)    vertex features
    w : (Cin, Cout) theta weight (transposed vs torch's (Cout, Cin))
    b : (1, Cout)   theta bias
    h : (N, E)      dense incidence matrix (0/1)
    """
    N, Cin = x.shape
    Cout = w.shape[1]
    E = h.shape[1]

    tn = _effective_tile(tile_n, N)
    te = _effective_tile(tile_e, E)
    n_pad = _round_up(N, tn)
    e_pad = _round_up(E, te)
    cin_pad = _round_up(Cin, _LANE)
    cout_pad = _round_up(Cout, _LANE)
    nt = n_pad // tn
    et = e_pad // te

    # Degree normalisers for the two 'mean' aggregations (f32; zero for empty rows/cols).
    h32 = h.astype(jnp.float32)
    d_e = jnp.sum(h32, axis=0)
    d_v = jnp.sum(h32, axis=1)
    inv_de = jnp.where(d_e > 0, 1.0 / d_e, 0.0)
    inv_dv = jnp.where(d_v > 0, 1.0 / d_v, 0.0)

    # Lane-dense, tile-aligned, bf16 operands (0/1 incidence is exact in bf16).
    x_p = jnp.zeros((n_pad, cin_pad), jnp.bfloat16).at[:N, :Cin].set(
        x.astype(jnp.bfloat16))
    w_p = jnp.zeros((cin_pad, cout_pad), jnp.bfloat16).at[:Cin, :Cout].set(
        w.astype(jnp.bfloat16))
    b_p = jnp.zeros((1, cout_pad), jnp.float32).at[:, :Cout].set(
        b.astype(jnp.float32))
    h_p = jnp.zeros((n_pad, e_pad), jnp.bfloat16).at[:N, :E].set(
        h.astype(jnp.bfloat16))
    inv_de_p = jnp.zeros((e_pad, 1), jnp.float32).at[:E, 0].set(inv_de)
    inv_dv_p = jnp.zeros((n_pad, 1), jnp.float32).at[:N, 0].set(inv_dv)

    bf2 = 2  # bytes / bf16
    out_itemsize = jnp.dtype(x.dtype).itemsize

    # --- K0: theta -----------------------------------------------------------
    xw = pl.pallas_call(
        _theta_kernel,
        out_shape=jax.ShapeDtypeStruct((n_pad, cout_pad), jnp.bfloat16),
        grid=(nt,),
        in_specs=[
            pl.BlockSpec((tn, cin_pad), lambda i: (i, 0)),
            pl.BlockSpec((cin_pad, cout_pad), lambda i: (0, 0)),
            pl.BlockSpec((1, cout_pad), lambda i: (0, 0)),
        ],
        out_specs=pl.BlockSpec((tn, cout_pad), lambda i: (i, 0)),
        compiler_params=pltpu.CompilerParams(
            dimension_semantics=("parallel",),
            vmem_limit_bytes=_VMEM_LIMIT),
        cost_estimate=pl.CostEstimate(
            flops=2 * n_pad * cin_pad * cout_pad,
            transcendentals=0,
            bytes_accessed=(n_pad * cin_pad * bf2 + cin_pad * cout_pad * bf2
                            + cout_pad * 4 + n_pad * cout_pad * bf2)),
    )(x_p, w_p, b_p)

    # --- K1: v2e (mean) ------------------------------------------------------
    v2e = functools.partial(_v2e_kernel, multi_step=nt > 1)
    y = pl.pallas_call(
        v2e,
        out_shape=jax.ShapeDtypeStruct((e_pad, cout_pad), jnp.bfloat16),
        grid=(et, nt),
        in_specs=[
            pl.BlockSpec((tn, te), lambda j, k: (k, j)),
            pl.BlockSpec((tn, cout_pad), lambda j, k: (k, 0)),
            pl.BlockSpec((te, 1), lambda j, k: (j, 0)),
        ],
        out_specs=pl.BlockSpec((te, cout_pad), lambda j, k: (j, 0)),
        scratch_shapes=([pltpu.VMEM((te, cout_pad), jnp.float32)]
                        if nt > 1 else []),
        compiler_params=pltpu.CompilerParams(
            dimension_semantics=("parallel", "arbitrary"),
            vmem_limit_bytes=_VMEM_LIMIT),
        cost_estimate=pl.CostEstimate(
            flops=2 * n_pad * e_pad * cout_pad,
            transcendentals=0,
            bytes_accessed=(n_pad * e_pad * bf2 + et * n_pad * cout_pad * bf2
                            + e_pad * 4 + e_pad * cout_pad * bf2)),
    )(h_p, xw, inv_de_p)

    # --- K2: e2v (mean) + ReLU + Dropout --------------------------------------
    e2v = functools.partial(_e2v_kernel, multi_step=et > 1,
                            training=bool(training),
                            drop_rate=float(drop_rate), seed=int(seed))
    out_p = pl.pallas_call(
        e2v,
        out_shape=jax.ShapeDtypeStruct((n_pad, cout_pad), x.dtype),
        grid=(nt, et),
        in_specs=[
            pl.BlockSpec((tn, te), lambda i, k: (i, k)),
            pl.BlockSpec((te, cout_pad), lambda i, k: (k, 0)),
            pl.BlockSpec((tn, 1), lambda i, k: (i, 0)),
        ],
        out_specs=pl.BlockSpec((tn, cout_pad), lambda i, k: (i, 0)),
        scratch_shapes=([pltpu.VMEM((tn, cout_pad), jnp.float32)]
                        if et > 1 else []),
        compiler_params=pltpu.CompilerParams(
            dimension_semantics=("parallel", "arbitrary"),
            vmem_limit_bytes=_VMEM_LIMIT),
        cost_estimate=pl.CostEstimate(
            flops=2 * n_pad * e_pad * cout_pad,
            transcendentals=0,
            bytes_accessed=(n_pad * e_pad * bf2 + nt * e_pad * cout_pad * bf2
                            + n_pad * 4 + n_pad * cout_pad * out_itemsize)),
    )(h_p, y, inv_dv_p)

    return out_p[:N, :Cout]


if __name__ == "__main__":
    # Small-but-tiled problem: 384 vertices, 320 hyperedges, 24 -> 48 channels.
    # 128-row/col tiles so the multi-step reduction / accumulator path is exercised.
    N, E, CIN, COUT = 384, 320, 24, 48
    TILE = 128
    key = jax.random.PRNGKey(0)
    kx, kh, kw, kb = jax.random.split(key, 4)

    x = jax.random.normal(kx, (N, CIN), dtype=jnp.float32)
    h = (jax.random.uniform(kh, (N, E)) < 0.15).astype(jnp.float32)  # dense 0/1 incidence

    # nn.Linear(in, out, bias=True) init: uniform(-1/sqrt(in), 1/sqrt(in)).
    bound = 1.0 / (CIN ** 0.5)
    w = jax.random.uniform(kw, (CIN, COUT), minval=-bound, maxval=bound,
                           dtype=jnp.float32)
    b = jax.random.uniform(kb, (1, COUT), minval=-bound, maxval=bound,
                           dtype=jnp.float32)

    # Eval mode (dropout = identity); training-mode dropout is implemented in-kernel
    # via the TPU PRNG (uint threshold compare) and enabled with training=True.
    out = hgnnp_conv(x, w, b, h, training=False, drop_rate=0.5, seed=0,
                     tile_n=TILE, tile_e=TILE)
    out = jax.block_until_ready(out)

    # --- references ----------------------------------------------------------
    d_e = jnp.sum(h, axis=0)
    d_v = jnp.sum(h, axis=1)
    inv_de = jnp.where(d_e > 0, 1.0 / d_e, 0.0)
    inv_dv = jnp.where(d_v > 0, 1.0 / d_v, 0.0)

    # (a) pure-f32 module semantics (loose tolerance: kernel uses bf16 matmul inputs).
    xw_f = x @ w + b
    y_f = (h.T @ xw_f) * inv_de[:, None]
    ref_f32 = jnp.maximum((h @ y_f) * inv_dv[:, None], 0.0)

    # (b) bf16-quantisation-matched reference (tight tolerance).
    f32 = jnp.float32
    xb = x.astype(jnp.bfloat16).astype(f32)
    wb = w.astype(jnp.bfloat16).astype(f32)
    xw_m = (xb @ wb + b).astype(jnp.bfloat16).astype(f32)
    y_m = ((h.T @ xw_m) * inv_de[:, None]).astype(jnp.bfloat16).astype(f32)
    ref_m = jnp.maximum((h @ y_m) * inv_dv[:, None], 0.0)

    assert jnp.allclose(out, ref_m, atol=2e-3, rtol=2e-3), \
        "mismatch vs bf16-matched reference"
    assert jnp.allclose(out, ref_f32, atol=3e-2, rtol=3e-2), \
        "mismatch vs f32 reference"

    # Also exercise the large-tile (single reduction step, scratch-free) path.
    out_big = jax.block_until_ready(
        hgnnp_conv(x, w, b, h, training=False, drop_rate=0.5, seed=0))
    assert jnp.allclose(out_big, ref_m, atol=2e-3, rtol=2e-3), \
        "mismatch vs bf16-matched reference (single-step path)"

    print("KERNEL_OK")
</pallas_src>

<mosaic_0001>
module attributes {stable_mosaic.version = 11 : i64} {
  func.func @_e2v_kernel(%arg0: i32, %arg1: i32, %arg2: memref<128x128xbf16, #tpu.memory_space<vmem>>, %arg3: memref<128x128xbf16, #tpu.memory_space<vmem>>, %arg4: memref<128x1xf32, #tpu.memory_space<vmem>>, %arg5: memref<128x128xf32, #tpu.memory_space<vmem>>, %arg6: memref<128x128xf32, #tpu.memory_space<vmem>>) attributes {dimension_semantics = [#tpu.dimension_semantics<parallel>, #tpu.dimension_semantics<arbitrary>], iteration_bounds = array<i64: 3, 3>, scalar_prefetch = 0 : i64, scratch_operands = 1 : i64, tpu.core_type = #tpu.core_type<tc>, window_params = [{transform_indices = @transform_0, window_bounds = array<i64: 128, 128>}, {transform_indices = @transform_1, window_bounds = array<i64: 128, 128>}, {transform_indices = @transform_2, window_bounds = array<i64: 128, 1>}, {transform_indices = @transform_3, window_bounds = array<i64: 128, 128>}]} {
    %c0 = arith.constant 0 : index
    %c0_0 = arith.constant 0 : index
    %0 = vector.load %arg2[%c0, %c0_0] : memref<128x128xbf16, #tpu.memory_space<vmem>>, vector<128x128xbf16>
    %c0_1 = arith.constant 0 : index
    %c0_2 = arith.constant 0 : index
    %1 = vector.load %arg3[%c0_1, %c0_2] : memref<128x128xbf16, #tpu.memory_space<vmem>>, vector<128x128xbf16>
    %cst = arith.constant dense<0.000000e+00> : vector<128x128xf32>
    %2 = tpu.matmul %0, %1, %cst {dimension_numbers = #tpu.dot_dimension_numbers<[1], [0], [0], [1], [0, 0, 1, 1], [], []>} : vector<128x128xbf16>, vector<128x128xbf16>, vector<128x128xf32> -> vector<128x128xf32>
    %c0_i32 = arith.constant 0 : i32
    %3 = arith.cmpi eq, %arg1, %c0_i32 : i32
    %4 = arith.extui %3 : i1 to i32
    %c0_i32_3 = arith.constant 0 : i32
    %5 = arith.cmpi ne, %4, %c0_i32_3 : i32
    scf.if %5 {
      %cst_9 = arith.constant 0.000000e+00 : f32
      %12 = vector.broadcast %cst_9 : f32 to vector<128x128xf32>
      %c0_10 = arith.constant 0 : index
      %c0_11 = arith.constant 0 : index
      %13 = vector.load %arg6[%c0_10, %c0_11] : memref<128x128xf32, #tpu.memory_space<vmem>>, vector<128x128xf32>
      tpu.vector_store %arg6[%c0_10, %c0_11], %12 {strides = array<i32>} : memref<128x128xf32, #tpu.memory_space<vmem>>, vector<128x128xf32>,
    } else {
    }
    %c0_4 = arith.constant 0 : index
    %c0_5 = arith.constant 0 : index
    %6 = vector.load %arg6[%c0_4, %c0_5] : memref<128x128xf32, #tpu.memory_space<vmem>>, vector<128x128xf32>
    %7 = arith.addf %6, %2 : vector<128x128xf32>
    %c0_6 = arith.constant 0 : index
    %c0_7 = arith.constant 0 : index
    %8 = vector.load %arg6[%c0_6, %c0_7] : memref<128x128xf32, #tpu.memory_space<vmem>>, vector<128x128xf32>
    tpu.vector_store %arg6[%c0_6, %c0_7], %7 {strides = array<i32>} : memref<128x128xf32, #tpu.memory_space<vmem>>, vector<128x128xf32>,
    %c2_i32 = arith.constant 2 : i32
    %9 = arith.cmpi eq, %arg1, %c2_i32 : i32
    %10 = arith.extui %9 : i1 to i32
    %c0_i32_8 = arith.constant 0 : i32
    %11 = arith.cmpi ne, %10, %c0_i32_8 : i32
    scf.if %11 {
      %c0_9 = arith.constant 0 : index
      %c0_10 = arith.constant 0 : index
      %12 = vector.load %arg6[%c0_9, %c0_10] : memref<128x128xf32, #tpu.memory_space<vmem>>, vector<128x128xf32>
      %c0_11 = arith.constant 0 : index
      %c0_12 = arith.constant 0 : index
      %13 = vector.load %arg4[%c0_11, %c0_12] : memref<128x1xf32, #tpu.memory_space<vmem>>, vector<128x1xf32>
      %14 = vector.broadcast %13 : vector<128x1xf32> to vector<128x128xf32>
      %15 = arith.mulf %12, %14 : vector<128x128xf32>
      %cst_13 = arith.constant 0.000000e+00 : f32
      %16 = vector.broadcast %cst_13 : f32 to vector<128x128xf32>
      %17 = arith.maximumf %15, %16 : vector<128x128xf32>
      %c0_14 = arith.constant 0 : index
      %c0_15 = arith.constant 0 : index
      %18 = vector.load %arg5[%c0_14, %c0_15] : memref<128x128xf32, #tpu.memory_space<vmem>>, vector<128x128xf32>
      tpu.vector_store %arg5[%c0_14, %c0_15], %17 {strides = array<i32>} : memref<128x128xf32, #tpu.memory_space<vmem>>, vector<128x128xf32>,
    } else {
    }
    return
  }
  func.func @transform_0(%arg0: i32, %arg1: i32) -> (i32, i32) {
    %c0_i32 = arith.constant 0 : i32
    return %arg0, %arg1 : i32, i32
  }
  func.func @transform_1(%arg0: i32, %arg1: i32) -> (i32, i32) {
    %c0_i32 = arith.constant 0 : i32
    %c0_i32_0 = arith.constant 0 : i32
    return %arg1, %c0_i32 : i32, i32
  }
  func.func @transform_2(%arg0: i32, %arg1: i32) -> (i32, i32) {
    %c0_i32 = arith.constant 0 : i32
    %c0_i32_0 = arith.constant 0 : i32
    return %arg0, %c0_i32 : i32, i32
  }
  func.func @transform_3(%arg0: i32, %arg1: i32) -> (i32, i32) {
    %c0_i32 = arith.constant 0 : i32
    %c0_i32_0 = arith.constant 0 : i32
    return %arg0, %c0_i32 : i32, i32
  }
}

module attributes {stable_mosaic.version = 11 : i64} {
  func.func @_theta_kernel(%arg0: i32, %arg1: memref<128x128xbf16, #tpu.memory_space<vmem>>, %arg2: memref<128x128xbf16, #tpu.memory_space<vmem>>, %arg3: memref<1x128xf32, #tpu.memory_space<vmem>>, %arg4: memref<128x128xbf16, #tpu.memory_space<vmem>>) attributes {dimension_semantics = [#tpu.dimension_semantics<parallel>], iteration_bounds = array<i64: 3>, scalar_prefetch = 0 : i64, scratch_operands = 0 : i64, tpu.core_type = #tpu.core_type<tc>, window_params = [{transform_indices = @transform_0, window_bounds = array<i64: 128, 128>}, {pipeline_mode = #tpu.pipeline_mode<synchronous>, transform_indices = @transform_1, window_bounds = array<i64: 128, 128>}, {pipeline_mode = #tpu.pipeline_mode<synchronous>, transform_indices = @transform_2, window_bounds = array<i64: 1, 128>}, {transform_indices = @transform_3, window_bounds = array<i64: 128, 128>}]} {
    %c0 = arith.constant 0 : index
    %c0_0 = arith.constant 0 : index
    %0 = vector.load %arg1[%c0, %c0_0] : memref<128x128xbf16, #tpu.memory_space<vmem>>, vector<128x128xbf16>
    %c0_1 = arith.constant 0 : index
    %c0_2 = arith.constant 0 : index
    %1 = vector.load %arg2[%c0_1, %c0_2] : memref<128x128xbf16, #tpu.memory_space<vmem>>, vector<128x128xbf16>
    %cst = arith.constant dense<0.000000e+00> : vector<128x128xf32>
    %2 = tpu.matmul %0, %1, %cst {dimension_numbers = #tpu.dot_dimension_numbers<[1], [0], [0], [1], [0, 0, 1, 1], [], []>} : vector<128x128xbf16>, vector<128x128xbf16>, vector<128x128xf32> -> vector<128x128xf32>
    %c0_3 = arith.constant 0 : index
    %c0_4 = arith.constant 0 : index
    %3 = vector.load %arg3[%c0_3, %c0_4] : memref<1x128xf32, #tpu.memory_space<vmem>>, vector<1x128xf32>
    %4 = vector.broadcast %3 : vector<1x128xf32> to vector<128x128xf32>
    %5 = arith.addf %2, %4 : vector<128x128xf32>
    %6 = arith.truncf %5 : vector<128x128xf32> to vector<128x128xbf16>
    %c0_5 = arith.constant 0 : index
    %c0_6 = arith.constant 0 : index
    %7 = vector.load %arg4[%c0_5, %c0_6] : memref<128x128xbf16, #tpu.memory_space<vmem>>, vector<128x128xbf16>
    tpu.vector_store %arg4[%c0_5, %c0_6], %6 {strides = array<i32>} : memref<128x128xbf16, #tpu.memory_space<vmem>>, vector<128x128xbf16>,
    return
  }
  func.func @transform_0(%arg0: i32) -> (i32, i32) {
    %c0_i32 = arith.constant 0 : i32
    %c0_i32_0 = arith.constant 0 : i32
    return %arg0, %c0_i32 : i32, i32
  }
  func.func @transform_1(%arg0: i32) -> (i32, i32) {
    %c0_i32 = arith.constant 0 : i32
    %c0_i32_0 = arith.constant 0 : i32
    %c0_i32_1 = arith.constant 0 : i32
    return %c0_i32, %c0_i32_0 : i32, i32
  }
  func.func @transform_2(%arg0: i32) -> (i32, i32) {
    %c0_i32 = arith.constant 0 : i32
    %c0_i32_0 = arith.constant 0 : i32
    %c0_i32_1 = arith.constant 0 : i32
    return %c0_i32, %c0_i32_0 : i32, i32
  }
  func.func @transform_3(%arg0: i32) -> (i32, i32) {
    %c0_i32 = arith.constant 0 : i32
    %c0_i32_0 = arith.constant 0 : i32
    return %arg0, %c0_i32 : i32, i32
  }
}

module attributes {stable_mosaic.version = 11 : i64} {
  func.func @_v2e_kernel(%arg0: i32, %arg1: i32, %arg2: memref<128x128xbf16, #tpu.memory_space<vmem>>, %arg3: memref<128x128xbf16, #tpu.memory_space<vmem>>, %arg4: memref<128x1xf32, #tpu.memory_space<vmem>>, %arg5: memref<128x128xbf16, #tpu.memory_space<vmem>>, %arg6: memref<128x128xf32, #tpu.memory_space<vmem>>) attributes {dimension_semantics = [#tpu.dimension_semantics<parallel>, #tpu.dimension_semantics<arbitrary>], iteration_bounds = array<i64: 3, 3>, scalar_prefetch = 0 : i64, scratch_operands = 1 : i64, tpu.core_type = #tpu.core_type<tc>, window_params = [{transform_indices = @transform_0, window_bounds = array<i64: 128, 128>}, {transform_indices = @transform_1, window_bounds = array<i64: 128, 128>}, {transform_indices = @transform_2, window_bounds = array<i64: 128, 1>}, {transform_indices = @transform_3, window_bounds = array<i64: 128, 128>}]} {
    %c0 = arith.constant 0 : index
    %c0_0 = arith.constant 0 : index
    %0 = vector.load %arg2[%c0, %c0_0] : memref<128x128xbf16, #tpu.memory_space<vmem>>, vector<128x128xbf16>
    %c0_1 = arith.constant 0 : index
    %c0_2 = arith.constant 0 : index
    %1 = vector.load %arg3[%c0_1, %c0_2] : memref<128x128xbf16, #tpu.memory_space<vmem>>, vector<128x128xbf16>
    %cst = arith.constant dense<0.000000e+00> : vector<128x128xf32>
    %2 = tpu.matmul %0, %1, %cst {dimension_numbers = #tpu.dot_dimension_numbers<[0], [0], [1], [1], [0, 1, 1, 1], [], []>} : vector<128x128xbf16>, vector<128x128xbf16>, vector<128x128xf32> -> vector<128x128xf32>
    %c0_i32 = arith.constant 0 : i32
    %3 = arith.cmpi eq, %arg1, %c0_i32 : i32
    %4 = arith.extui %3 : i1 to i32
    %c0_i32_3 = arith.constant 0 : i32
    %5 = arith.cmpi ne, %4, %c0_i32_3 : i32
    scf.if %5 {
      %cst_9 = arith.constant 0.000000e+00 : f32
      %12 = vector.broadcast %cst_9 : f32 to vector<128x128xf32>
      %c0_10 = arith.constant 0 : index
      %c0_11 = arith.constant 0 : index
      %13 = vector.load %arg6[%c0_10, %c0_11] : memref<128x128xf32, #tpu.memory_space<vmem>>, vector<128x128xf32>
      tpu.vector_store %arg6[%c0_10, %c0_11], %12 {strides = array<i32>} : memref<128x128xf32, #tpu.memory_space<vmem>>, vector<128x128xf32>,
    } else {
    }
    %c0_4 = arith.constant 0 : index
    %c0_5 = arith.constant 0 : index
    %6 = vector.load %arg6[%c0_4, %c0_5] : memref<128x128xf32, #tpu.memory_space<vmem>>, vector<128x128xf32>
    %7 = arith.addf %6, %2 : vector<128x128xf32>
    %c0_6 = arith.constant 0 : index
    %c0_7 = arith.constant 0 : index
    %8 = vector.load %arg6[%c0_6, %c0_7] : memref<128x128xf32, #tpu.memory_space<vmem>>, vector<128x128xf32>
    tpu.vector_store %arg6[%c0_6, %c0_7], %7 {strides = array<i32>} : memref<128x128xf32, #tpu.memory_space<vmem>>, vector<128x128xf32>,
    %c2_i32 = arith.constant 2 : i32
    %9 = arith.cmpi eq, %arg1, %c2_i32 : i32
    %10 = arith.extui %9 : i1 to i32
    %c0_i32_8 = arith.constant 0 : i32
    %11 = arith.cmpi ne, %10, %c0_i32_8 : i32
    scf.if %11 {
      %c0_9 = arith.constant 0 : index
      %c0_10 = arith.constant 0 : index
      %12 = vector.load %arg6[%c0_9, %c0_10] : memref<128x128xf32, #tpu.memory_space<vmem>>, vector<128x128xf32>
      %c0_11 = arith.constant 0 : index
      %c0_12 = arith.constant 0 : index
      %13 = vector.load %arg4[%c0_11, %c0_12] : memref<128x1xf32, #tpu.memory_space<vmem>>, vector<128x1xf32>
      %14 = vector.broadcast %13 : vector<128x1xf32> to vector<128x128xf32>
      %15 = arith.mulf %12, %14 : vector<128x128xf32>
      %16 = arith.truncf %15 : vector<128x128xf32> to vector<128x128xbf16>
      %c0_13 = arith.constant 0 : index
      %c0_14 = arith.constant 0 : index
      %17 = vector.load %arg5[%c0_13, %c0_14] : memref<128x128xbf16, #tpu.memory_space<vmem>>, vector<128x128xbf16>
      tpu.vector_store %arg5[%c0_13, %c0_14], %16 {strides = array<i32>} : memref<128x128xbf16, #tpu.memory_space<vmem>>, vector<128x128xbf16>,
    } else {
    }
    return
  }
  func.func @transform_0(%arg0: i32, %arg1: i32) -> (i32, i32) {
    %c0_i32 = arith.constant 0 : i32
    return %arg1, %arg0 : i32, i32
  }
  func.func @transform_1(%arg0: i32, %arg1: i32) -> (i32, i32) {
    %c0_i32 = arith.constant 0 : i32
    %c0_i32_0 = arith.constant 0 : i32
    return %arg1, %c0_i32 : i32, i32
  }
  func.func @transform_2(%arg0: i32, %arg1: i32) -> (i32, i32) {
    %c0_i32 = arith.constant 0 : i32
    %c0_i32_0 = arith.constant 0 : i32
    return %arg0, %c0_i32 : i32, i32
  }
  func.func @transform_3(%arg0: i32, %arg1: i32) -> (i32, i32) {
    %c0_i32 = arith.constant 0 : i32
    %c0_i32_0 = arith.constant 0 : i32
    return %arg0, %c0_i32 : i32, i32
  }
}

</mosaic_0001>

<llo_original>
// kernel: hgnnp_conv.3
$region0: #{hgnnp_conv.3}
  #allocation0 [shape = 'u32[]', space=smem, size = 0x4, offset = 0x4, fixed_abs, tag = 'smem constant byte address 0x4 - core index']
  #allocation1 [shape = 'u32[144,128]{1,0:T(1,128)}', space=vmem, size = 0x12000, scoped, tag = 'internal scratch']
  %s0 = inlined_call_operand.vmem [shape: bf16[384,128], index: 0, kind: input, shape index: {}]
  %s1 = inlined_call_operand.vmem [shape: bf16[128,128], index: 1, kind: input, shape index: {}]
  %s2 = inlined_call_operand.vmem [shape: f32[1,128], index: 2, kind: input, shape index: {}]
  %s3 = inlined_call_operand.vmem [shape: bf16[384,128], index: 3, kind: output, shape index: {}]
  %s4 = sld [smem:[#allocation0]]
  $region45: #{hgnnp_conv.3} parent=0
    _
  %s6 = ssub.s32 1, %s4
  %s7 = scalar_select 0, %s6, %s4
  loop: start=0, step=1, limit=5
  $region2: #{hgnnp_conv.3} parent=0 // loop_pre_header
    _
  $region3: #{hgnnp_conv.3} parent=0 // loop_header
    %s9 = sphi 0, %s13
    %p10 = scmp.ge.s32.totalorder %s9, 5
    %s19 = sphi 0, %s21
    %s22 = sphi 0, %s19
    %s23 = sphi 0, %s22
    %s39 = sphi 0, %s23
    %s43 = sphi 0, %s43
    %s45 = sphi 0, %s43
    %s46 = sphi 0, %s45
    %s60 = sphi 0, %s46
    %s64 = sphi 0, %s64
    %s66 = sphi 0, %s64
    %s67 = sphi 0, %s66
    %s81 = sphi 0, %s67
    %s87 = sphi 0, %s89
    %s90 = sphi 0, %s87
    %s91 = sphi 0, %s90
    %s107 = sphi 0, %s91
  $region4: #{hgnnp_conv.3} parent=0 // loop_header_branch
    %12 = sbr.rel (%p10) target = $region8
  $region5: #{hgnnp_conv.3} parent=0 // loop_body
    %s14 = ssub.s32 %s9, 1
    %s15 = ssub.s32 %s9, 2
    %s16 = sadd.s32 %s9, 1
    %s17 = ssub.s32 %s9, %s16
    %p18 = scmp.eq.s32.totalorder %s17, 0
    %s20 = sadd.s32 %s19, 1
    %s21 = scalar_select %p18, %s19, %s20
    %p24 = pneg %p18
    %p25 = scmp.eq.s32.totalorder %s9, 2
    %p26 = por %p24, %p25
    %p27 = scmp.ne.s32.totalorder %s19, %s22
    %p28 = scmp.eq.s32.totalorder %s9, 0
    %p29 = por %p27, %p28
    %p30 = scmp.ne.s32.totalorder %s19, %s22
    %p31 = scmp.eq.s32.totalorder %s14, 2
    %p32 = por %p30, %p31
    %p33 = scmp.ne.s32.totalorder %s22, %s23
    %p34 = scmp.eq.s32.totalorder %s14, 0
    %p35 = por %p33, %p34
    %p36 = scmp.ne.s32.totalorder %s22, %s23
    %p37 = scmp.eq.s32.totalorder %s15, 2
    %p38 = por %p36, %p37
    %p40 = scmp.ne.s32.totalorder %s23, %s39
    %p41 = scmp.eq.s32.totalorder %s15, 0
    %p42 = por %p40, %p41
    %s44 = sadd.s32 %s43, 1
    %p47 = scmp.eq.s32.totalorder %s9, 2
    %p48 = scmp.ne.s32.totalorder %s43, %s45
    %p49 = scmp.eq.s32.totalorder %s9, 0
    %p50 = por %p48, %p49
    %p51 = scmp.ne.s32.totalorder %s43, %s45
    %p52 = scmp.eq.s32.totalorder %s14, 2
    %p53 = por %p51, %p52
    %p54 = scmp.ne.s32.totalorder %s45, %s46
    %p55 = scmp.eq.s32.totalorder %s14, 0
    %p56 = por %p54, %p55
    %p57 = scmp.ne.s32.totalorder %s45, %s46
    %p58 = scmp.eq.s32.totalorder %s15, 2
    %p59 = por %p57, %p58
    %p61 = scmp.ne.s32.totalorder %s46, %s60
    %p62 = scmp.eq.s32.totalorder %s15, 0
    %p63 = por %p61, %p62
    %s65 = sadd.s32 %s64, 1
    %p68 = scmp.eq.s32.totalorder %s9, 2
    %p69 = scmp.ne.s32.totalorder %s64, %s66
    %p70 = scmp.eq.s32.totalorder %s9, 0
    %p71 = por %p69, %p70
    %p72 = scmp.ne.s32.totalorder %s64, %s66
    %p73 = scmp.eq.s32.totalorder %s14, 2
    %p74 = por %p72, %p73
    %p75 = scmp.ne.s32.totalorder %s66, %s67
    %p76 = scmp.eq.s32.totalorder %s14, 0
    %p77 = por %p75, %p76
    %p78 = scmp.ne.s32.totalorder %s66, %s67
    %p79 = scmp.eq.s32.totalorder %s15, 2
    %p80 = por %p78, %p79
    %p82 = scmp.ne.s32.totalorder %s67, %s81
    %p83 = scmp.eq.s32.totalorder %s15, 0
    %p84 = por %p82, %p83
    %s85 = ssub.s32 %s9, %s16
    %p86 = scmp.eq.s32.totalorder %s85, 0
    %s88 = sadd.s32 %s87, 1
    %s89 = scalar_select %p86, %s87, %s88
    %p92 = pneg %p86
    %p93 = scmp.eq.s32.totalorder %s9, 2
    %p94 = por %p92, %p93
    %p95 = scmp.ne.s32.totalorder %s87, %s90
    %p96 = scmp.eq.s32.totalorder %s9, 0
    %p97 = por %p95, %p96
    %p98 = scmp.ne.s32.totalorder %s87, %s90
    %p99 = scmp.eq.s32.totalorder %s14, 2
    %p100 = por %p98, %p99
    %p101 = scmp.ne.s32.totalorder %s90, %s91
    %p102 = scmp.eq.s32.totalorder %s14, 0
    %p103 = por %p101, %p102
    %p104 = scmp.ne.s32.totalorder %s90, %s91
    %p105 = scmp.eq.s32.totalorder %s15, 2
    %p106 = por %p104, %p105
    %p108 = scmp.ne.s32.totalorder %s91, %s107
    %p109 = scmp.eq.s32.totalorder %s15, 0
    %p110 = por %p108, %p109
    %p111 = scmp.le.s32.totalorder 1, %s9
    %p112 = scmp.lt.s32.totalorder %s9, 4
    %p113 = pnand %p111, %p112
    %p114 = pneg %p113
    // Predicated region
    $region9: #{hgnnp_conv.3} parent=5 // pred_check
      _
    $region10: #{hgnnp_conv.3} parent=5 // pred_check_branch
      %116 = sbr.rel (%p113) target = $region12
    $region11: #{hgnnp_conv.3} parent=5 // pred_region
      %s117 = ssub.s32 %s9, 1
      // Predicated region
      $region13: #{hgnnp_conv.3} parent=11 // pred_check
        %p118 = pneg %p56
      $region14: #{hgnnp_conv.3} parent=11 // pred_check_branch
        %120 = sbr.rel (%p118) target = $region16
      $region15: #{hgnnp_conv.3} parent=11 // pred_region
        _
      $region16: #{hgnnp_conv.3} parent=11 // pred_fallthru
        _
      // Predicated region
      $region17: #{hgnnp_conv.3} parent=11 // pred_check
        %p121 = pneg %p77
      $region18: #{hgnnp_conv.3} parent=11 // pred_check_branch
        %123 = sbr.rel (%p121) target = $region20
      $region19: #{hgnnp_conv.3} parent=11 // pred_region
        _
      $region20: #{hgnnp_conv.3} parent=11 // pred_fallthru
        _
    $region12: #{hgnnp_conv.3} parent=5 // pred_fallthru
      _
    %p124 = scmp.lt.s32.totalorder %s9, 3
    // Predicated region
    $region21: #{hgnnp_conv.3} parent=5 // pred_check
      %p125 = pneg %p124
    $region22: #{hgnnp_conv.3} parent=5 // pred_check_branch
      %127 = sbr.rel (%p125) target = $region24
    $region23: #{hgnnp_conv.3} parent=5 // pred_region
      // Predicated region
      $region25: #{hgnnp_conv.3} parent=23 // pred_check
        %p128 = pneg %p29
      $region26: #{hgnnp_conv.3} parent=23 // pred_check_branch
        %130 = sbr.rel (%p128) target = $region28
      $region27: #{hgnnp_conv.3} parent=23 // pred_region
        %s131 = smul.u32 16, %s9
        %p132 = scmp.lt.s32.totalorder %s131, 47
        %s133 = scalar_select %p132, %s131, 47
        %s134 = smul.addr %s133, 4
        %s135 = scalar_lea.vmem %s0, %s134
        %s136 = smul.u32 16, %s9
      $region28: #{hgnnp_conv.3} parent=23 // pred_fallthru
        _
    $region24: #{hgnnp_conv.3} parent=5 // pred_fallthru
      _
    %p137 = scmp.le.s32.totalorder 1, %s9
    %p138 = scmp.lt.s32.totalorder %s9, 4
    %p139 = pnand %p137, %p138
    %p140 = pneg %p139
    // Predicated region
    $region29: #{hgnnp_conv.3} parent=5 // pred_check
      _
    $region30: #{hgnnp_conv.3} parent=5 // pred_check_branch
      %142 = sbr.rel (%p139) target = $region32
    $region31: #{hgnnp_conv.3} parent=5 // pred_region
      %s143 = ssub.s32 %s9, 1
      %s144 = smul.u32 16, %s14
      %p145 = scmp.lt.s32.totalorder %s144, 47
      %s146 = scalar_select %p145, %s144, 47
      %s147 = smul.addr %s146, 4
      %s148 = scalar_lea.vmem %s0, %s147
      %p149 = pneg %p35
      %p150 = pneg %p32
      %p151 = pneg %p56
      %p152 = pneg %p53
      %p153 = pneg %p77
      %p154 = pneg %p74
      %p155 = pneg %p103
      %p156 = pneg %p100
      %s157 = smul.u32 16, %s14
      %p158 = scmp.lt.s32.totalorder %s157, 47
      %s159 = scalar_select %p158, %s157, 47
      %s160 = smul.addr %s159, 4
      %s161 = scalar_lea.vmem %s3, %s160
      %s162 = smul.u32 16, %s14
      %p163 = scmp.lt.s32.totalorder %s162, 47
      %s164 = scalar_select %p163, %s162, 47
      %s165 = smul.addr %s164, 4
      %s166 = scalar_lea.vmem %s0, %s165
      %s167 = smul.u32 16, %s14
      %s168 = smul.u32 16, %s14
      %p169 = scmp.lt.s32.totalorder %s168, 47
      %s170 = scalar_select %p169, %s168, 47
      %s171 = smul.addr %s170, 4
      %s172 = scalar_lea.vmem %s3, %s171
      %s173 = smul.u32 16, %s14
      %v175 = vld [vmem:[%s166] sm:$0xf]
      %v176 = vld [vmem:[%s166 + $0x4] sm:$0xf]
      %v177 = vld [vmem:[%s166 + $0x8] sm:$0xf]
      %v178 = vld [vmem:[%s166 + $0xc] sm:$0xf]
      %v179 = vld [vmem:[%s166 + $0x10] sm:$0xf]
      %v180 = vld [vmem:[%s166 + $0x14] sm:$0xf]
      %v181 = vld [vmem:[%s166 + $0x18] sm:$0xf]
      %v182 = vld [vmem:[%s166 + $0x1c] sm:$0xf]
      %v183 = vld [vmem:[%s166 + $0x20] sm:$0xf]
      %v184 = vld [vmem:[%s166 + $0x24] sm:$0xf]
      %v185 = vld [vmem:[%s166 + $0x28] sm:$0xf]
      %v186 = vld [vmem:[%s166 + $0x2c] sm:$0xf]
      %v187 = vld [vmem:[%s166 + $0x30] sm:$0xf]
      %v188 = vld [vmem:[%s166 + $0x34] sm:$0xf]
      %v189 = vld [vmem:[%s166 + $0x38] sm:$0xf]
      %v190 = vld [vmem:[%s166 + $0x3c] sm:$0xf]
      %v191 = vld [vmem:[%s1] sm:$0xf]
      %v192 = vld [vmem:[%s1 + $0x4] sm:$0xf]
      %v193 = vld [vmem:[%s1 + $0x8] sm:$0xf]
      %v194 = vld [vmem:[%s1 + $0xc] sm:$0xf]
      %v195 = vld [vmem:[%s1 + $0x10] sm:$0xf]
      %v196 = vld [vmem:[%s1 + $0x14] sm:$0xf]
      %v197 = vld [vmem:[%s1 + $0x18] sm:$0xf]
      %v198 = vld [vmem:[%s1 + $0x1c] sm:$0xf]
      %v199 = vld [vmem:[%s1 + $0x20] sm:$0xf]
      %v200 = vld [vmem:[%s1 + $0x24] sm:$0xf]
      %v201 = vld [vmem:[%s1 + $0x28] sm:$0xf]
      %v202 = vld [vmem:[%s1 + $0x2c] sm:$0xf]
      %v203 = vld [vmem:[%s1 + $0x30] sm:$0xf]
      %v204 = vld [vmem:[%s1 + $0x34] sm:$0xf]
      %v205 = vld [vmem:[%s1 + $0x38] sm:$0xf]
      %v206 = vld [vmem:[%s1 + $0x3c] sm:$0xf]
      %v207 = vld [vmem:[%s2] sm:$0x1]
      %v209 = vlaneseq
      %v210 = vshrl.u32 %v209, 7
      %v211 = vsub.s32 0, %v210
      %v212 = vrot.slane %v207, %v211
      %v230 = vunpack.c.l.b16 %v175
      %v231 = vunpack.c.l.b16 %v176
      %v232 = vunpack.c.l.b16 %v177
      %v233 = vunpack.c.l.b16 %v178
      %v234 = vunpack.c.l.b16 %v179
      %v235 = vunpack.c.l.b16 %v180
      %v236 = vunpack.c.l.b16 %v181
      %v237 = vunpack.c.l.b16 %v182
      %v238 = vunpack.c.l.b16 %v183
      %v239 = vunpack.c.l.b16 %v184
      %v240 = vunpack.c.l.b16 %v185
      %v241 = vunpack.c.l.b16 %v186
      %v242 = vunpack.c.l.b16 %v187
      %v243 = vunpack.c.l.b16 %v188
      %v244 = vunpack.c.l.b16 %v189
      %v245 = vunpack.c.l.b16 %v190
      %v246 = vpack.c.b16 %v231, %v230
      %v247 = vpack.c.b16 %v233, %v232
      %v248 = vpack.c.b16 %v235, %v234
      %v249 = vpack.c.b16 %v237, %v236
      %v250 = vpack.c.b16 %v239, %v238
      %v251 = vpack.c.b16 %v241, %v240
      %v252 = vpack.c.b16 %v243, %v242
      %v253 = vpack.c.b16 %v245, %v244
      %v278 = vunpack.c.l.b16 %v191
      %v279 = vunpack.c.l.b16 %v192
      %v280 = vunpack.c.l.b16 %v193
      %v281 = vunpack.c.l.b16 %v194
      %v282 = vunpack.c.l.b16 %v195
      %v283 = vunpack.c.l.b16 %v196
      %v284 = vunpack.c.l.b16 %v197
      %v285 = vunpack.c.l.b16 %v198
      %v286 = vunpack.c.l.b16 %v199
      %v287 = vunpack.c.l.b16 %v200
      %v288 = vunpack.c.l.b16 %v201
      %v289 = vunpack.c.l.b16 %v202
      %v290 = vunpack.c.l.b16 %v203
      %v291 = vunpack.c.l.b16 %v204
      %v292 = vunpack.c.l.b16 %v205
      %v293 = vunpack.c.l.b16 %v206
      %v294 = vpack.c.b16 %v279, %v278
      %v295 = vpack.c.b16 %v281, %v280
      %v296 = vpack.c.b16 %v283, %v282
      %v297 = vpack.c.b16 %v285, %v284
      %v298 = vpack.c.b16 %v287, %v286
      %v299 = vpack.c.b16 %v289, %v288
      %v300 = vpack.c.b16 %v291, %v290
      %v301 = vpack.c.b16 %v293, %v292
      %310 = vmatprep.subr.bf16.mxu0 0
      %311 = vmatpush1.bf16.msra.mxu0 %v301
      %312 = vmatprep.subr.bf16.mxu0 0
      %313 = vmatpush1.bf16.msra.mxu0 %v300
      %314 = vmatprep.subr.bf16.mxu0 0
      %315 = vmatpush1.bf16.msra.mxu0 %v299
      %316 = vmatprep.subr.bf16.mxu0 0
      %317 = vmatpush1.bf16.msra.mxu0 %v298
      %318 = vmatprep.subr.bf16.mxu0 0
      %319 = vmatpush1.bf16.msra.mxu0 %v297
      %320 = vmatprep.subr.bf16.mxu0 0
      %321 = vmatpush1.bf16.msra.mxu0 %v296
      %322 = vmatprep.subr.bf16.mxu0 0
      %323 = vmatpush1.bf16.msra.mxu0 %v295
      %324 = vmatprep.subr.bf16.mxu0 0
      %325 = vmatpush1.bf16.msra.mxu0 %v294
      %326 = vmatprep.subr.bf16.mxu0 0
      %327 = vmatpush2.bf16.msra.mxu0 0
      %328 = vmatprep.subr.bf16.mxu0 0
      %329 = vmatpush2.bf16.msra.mxu0 0
      %330 = vmatprep.subr.bf16.mxu0 0
      %331 = vmatpush2.bf16.msra.mxu0 0
      %332 = vmatprep.subr.bf16.mxu0 0
      %333 = vmatpush2.bf16.msra.mxu0 0
      %334 = vmatprep.subr.bf16.mxu0 0
      %335 = vmatpush2.bf16.msra.mxu0 0
      %336 = vmatprep.subr.bf16.mxu0 0
      %337 = vmatpush2.bf16.msra.mxu0 0
      %338 = vmatprep.subr.bf16.mxu0 0
      %339 = vmatpush2.bf16.msra.mxu0 0
      %340 = vmatprep.subr.bf16.mxu0 0
      %341 = vmatpush2.bf16.msra.mxu0 0
      %342 = vmatprep.mubr.bf16.mxu0 0
      %343 = vmatmul.mubr.bf16.gmra.mxu0 %v246
      %v344 = vpop.f32.mrf.mxu0
      %v345 = vadd.f32 %v212, %v344
      %v346 = vpop.f32.mrf.mxu0
      %v347 = vpop.f32.mrf.mxu0
      %v348 = vadd.f32 %v212, %v347
      %v349 = vpop.f32.mrf.mxu0
      %350 = vmatprep.mubr.bf16.mxu0 0
      %351 = vmatmul.mubr.bf16.gmra.mxu0 %v247
      %v352 = vpop.f32.mrf.mxu0
      %v353 = vadd.f32 %v212, %v352
      %v354 = vpop.f32.mrf.mxu0
      %v355 = vpop.f32.mrf.mxu0
      %v356 = vadd.f32 %v212, %v355
      %v357 = vpop.f32.mrf.mxu0
      %358 = vmatprep.mubr.bf16.mxu0 0
      %359 = vmatmul.mubr.bf16.gmra.mxu0 %v248
      %v360 = vpop.f32.mrf.mxu0
      %v361 = vadd.f32 %v212, %v360
      %v362 = vpop.f32.mrf.mxu0
      %v363 = vpop.f32.mrf.mxu0
      %v364 = vadd.f32 %v212, %v363
      %v365 = vpop.f32.mrf.mxu0
      %366 = vmatprep.mubr.bf16.mxu0 0
      %367 = vmatmul.mubr.bf16.gmra.mxu0 %v249
      %v368 = vpop.f32.mrf.mxu0
      %v369 = vadd.f32 %v212, %v368
      %v370 = vpop.f32.mrf.mxu0
      %v371 = vpop.f32.mrf.mxu0
      %v372 = vadd.f32 %v212, %v371
      %v373 = vpop.f32.mrf.mxu0
      %374 = vmatprep.mubr.bf16.mxu0 0
      %375 = vmatmul.mubr.bf16.gmra.mxu0 %v250
      %v376 = vpop.f32.mrf.mxu0
      %v377 = vadd.f32 %v212, %v376
      %v378 = vpop.f32.mrf.mxu0
      %v379 = vpop.f32.mrf.mxu0
      %v380 = vadd.f32 %v212, %v379
      %v381 = vpop.f32.mrf.mxu0
      %382 = vmatprep.mubr.bf16.mxu0 0
      %383 = vmatmul.mubr.bf16.gmra.mxu0 %v251
      %v384 = vpop.f32.mrf.mxu0
      %v385 = vadd.f32 %v212, %v384
      %v386 = vpop.f32.mrf.mxu0
      %v387 = vpop.f32.mrf.mxu0
      %v388 = vadd.f32 %v212, %v387
      %v389 = vpop.f32.mrf.mxu0
      %390 = vmatprep.mubr.bf16.mxu0 0
      %391 = vmatmul.mubr.bf16.gmra.mxu0 %v252
      %v392 = vpop.f32.mrf.mxu0
      %v393 = vadd.f32 %v212, %v392
      %v394 = vpop.f32.mrf.mxu0
      %v395 = vpop.f32.mrf.mxu0
      %v396 = vadd.f32 %v212, %v395
      %v397 = vpop.f32.mrf.mxu0
      %398 = vmatprep.mubr.bf16.mxu0 0
      %399 = vmatmul.mubr.bf16.gmra.mxu0 %v253
      %v400 = vpop.f32.mrf.mxu0
      %v401 = vadd.f32 %v212, %v400
      %v402 = vpop.f32.mrf.mxu0
      %v403 = vpop.f32.mrf.mxu0
      %v404 = vadd.f32 %v212, %v403
      %v405 = vpop.f32.mrf.mxu0
      %406 = vdwg.mxu0
      %v407 = vpack.c.bf16 %v348, %v345
      %v408 = vpack.c.bf16 %v356, %v353
      %v409 = vpack.c.bf16 %v364, %v361
      %v410 = vpack.c.bf16 %v372, %v369
      %v411 = vpack.c.bf16 %v380, %v377
      %v412 = vpack.c.bf16 %v388, %v385
      %v413 = vpack.c.bf16 %v396, %v393
      %v414 = vpack.c.bf16 %v404, %v401
      %v423 = vunpack.c.l.b16 %v407
      %v424 = vunpack.c.h.b16 %v407
      %v425 = vunpack.c.l.b16 %v408
      %v426 = vunpack.c.h.b16 %v408
      %v427 = vunpack.c.l.b16 %v409
      %v428 = vunpack.c.h.b16 %v409
      %v429 = vunpack.c.l.b16 %v410
      %v430 = vunpack.c.h.b16 %v410
      %v431 = vunpack.c.l.b16 %v411
      %v432 = vunpack.c.h.b16 %v411
      %v433 = vunpack.c.l.b16 %v412
      %v434 = vunpack.c.h.b16 %v412
      %v435 = vunpack.c.l.b16 %v413
      %v436 = vunpack.c.h.b16 %v413
      %v437 = vunpack.c.l.b16 %v414
      %v438 = vunpack.c.h.b16 %v414
      %v439 = vpack.c.b16 %v423, %v423
      %v440 = vpack.c.b16 %v424, %v424
      %v441 = vpack.c.b16 %v425, %v425
      %v442 = vpack.c.b16 %v426, %v426
      %v443 = vpack.c.b16 %v427, %v427
      %v444 = vpack.c.b16 %v428, %v428
      %v445 = vpack.c.b16 %v429, %v429
      %v446 = vpack.c.b16 %v430, %v430
      %v447 = vpack.c.b16 %v431, %v431
      %v448 = vpack.c.b16 %v432, %v432
      %v449 = vpack.c.b16 %v433, %v433
      %v450 = vpack.c.b16 %v434, %v434
      %v451 = vpack.c.b16 %v435, %v435
      %v452 = vpack.c.b16 %v436, %v436
      %v453 = vpack.c.b16 %v437, %v437
      %v454 = vpack.c.b16 %v438, %v438
      %471 = vst [vmem:[%s172] sm:$0xf] %v439
      %472 = vst [vmem:[%s172 + $0x4] sm:$0xf] %v440
      %473 = vst [vmem:[%s172 + $0x8] sm:$0xf] %v441
      %474 = vst [vmem:[%s172 + $0xc] sm:$0xf] %v442
      %475 = vst [vmem:[%s172 + $0x10] sm:$0xf] %v443
      %476 = vst [vmem:[%s172 + $0x14] sm:$0xf] %v444
      %477 = vst [vmem:[%s172 + $0x18] sm:$0xf] %v445
      %478 = vst [vmem:[%s172 + $0x1c] sm:$0xf] %v446
      %479 = vst [vmem:[%s172 + $0x20] sm:$0xf] %v447
      %480 = vst [vmem:[%s172 + $0x24] sm:$0xf] %v448
      %481 = vst [vmem:[%s172 + $0x28] sm:$0xf] %v449
      %482 = vst [vmem:[%s172 + $0x2c] sm:$0xf] %v450
      %483 = vst [vmem:[%s172 + $0x30] sm:$0xf] %v451
      %484 = vst [vmem:[%s172 + $0x34] sm:$0xf] %v452
      %485 = vst [vmem:[%s172 + $0x38] sm:$0xf] %v453
      %486 = vst [vmem:[%s172 + $0x3c] sm:$0xf] %v454
      %s487 = smul.u32 16, %s14
      %p488 = scmp.lt.s32.totalorder %s487, 47
      %s489 = scalar_select %p488, %s487, 47
      %s490 = smul.addr %s489, 4
      %s491 = scalar_lea.vmem %s3, %s490
      // Predicated region
      $region33: #{hgnnp_conv.3} parent=31 // pred_check
        %p492 = pneg %p100
      $region34: #{hgnnp_conv.3} parent=31 // pred_check_branch
        %494 = sbr.rel (%p492) target = $region36
      $region35: #{hgnnp_conv.3} parent=31 // pred_region
        %s495 = smul.u32 16, %s14
      $region36: #{hgnnp_conv.3} parent=31 // pred_fallthru
        _
    $region32: #{hgnnp_conv.3} parent=5 // pred_fallthru
      _
    %p496 = scmp.le.s32.totalorder 2, %s9
    // Predicated region
    $region37: #{hgnnp_conv.3} parent=5 // pred_check
      %p497 = pneg %p496
    $region38: #{hgnnp_conv.3} parent=5 // pred_check_branch
      %499 = sbr.rel (%p497) target = $region40
    $region39: #{hgnnp_conv.3} parent=5 // pred_region
      %s500 = ssub.s32 %s9, 2
      // Predicated region
      $region41: #{hgnnp_conv.3} parent=39 // pred_check
        %p501 = pneg %p106
      $region42: #{hgnnp_conv.3} parent=39 // pred_check_branch
        %503 = sbr.rel (%p501) target = $region44
      $region43: #{hgnnp_conv.3} parent=39 // pred_region
        %s504 = smul.u32 16, %s15
        %p505 = scmp.lt.s32.totalorder %s504, 47
        %s506 = scalar_select %p505, %s504, 47
        %s507 = smul.addr %s506, 4
        %s508 = scalar_lea.vmem %s3, %s507
      $region44: #{hgnnp_conv.3} parent=39 // pred_fallthru
        _
    $region40: #{hgnnp_conv.3} parent=5 // pred_fallthru
      _
  $region6: #{hgnnp_conv.3} parent=0 // loop_footer
    %s13 = sadd.s32 1, %s9
  $region7: #{hgnnp_conv.3} parent=0 // loop_footer_branch
    %8 = sbr.rel target = $region3
  $region8: #{hgnnp_conv.3} parent=0 // loop_exit
    _

// kernel: hgnnp_conv.5
$region0: #{hgnnp_conv.5}
  #allocation0 [shape = 'u32[]', space=smem, size = 0x4, offset = 0x4, fixed_abs, tag = 'smem constant byte address 0x4 - core index']
  #allocation1 [shape = 'u32[144,128]{1,0:T(1,128)}', space=vmem, size = 0x12000, scoped, tag = 'internal scratch']
  #allocation2 [shape = 'f32[128,128]{1,0:T(8,128)}', space=vmem, size = 0x10000, scoped, tag = 'scratch operand']
  %s0 = inlined_call_operand.vmem [shape: bf16[384,384], index: 0, kind: input, shape index: {}]
  %s1 = inlined_call_operand.vmem [shape: bf16[384,128], index: 1, kind: input, shape index: {}]
  %s2 = inlined_call_operand.vmem [shape: f32[384,1], index: 2, kind: input, shape index: {}]
  %s3 = inlined_call_operand.vmem [shape: f32[384,128], index: 3, kind: output, shape index: {}]
  %s4 = sld [smem:[#allocation0]]
  $region94: #{hgnnp_conv.5} parent=0
    _
  %s6 = ssub.s32 1, %s4
  %s7 = scalar_select 0, %s6, %s4
  $region1: #{hgnnp_conv.5} parent=0
    #allocation3 [shape = 'u8[65536]{0}', space=vmem, size = 0x10000, scoped, tag = 'input window, operand 0']
    loop: start=0, step=1, limit=11
    $region2: #{hgnnp_conv.5} parent=1 // loop_pre_header
      _
    $region3: #{hgnnp_conv.5} parent=1 // loop_header
      %s9 = sphi 0, %s13
      %p10 = scmp.ge.s32.totalorder %s9, 11
      %s16 = sphi 0, %s28
      %s17 = sphi 0, %s24
      %s18 = sphi 0, %s16
      %s19 = sphi 0, %s17
      %s20 = sphi 0, %s18
      %s21 = sphi 0, %s19
      %s33 = sphi 0, %s35
      %s36 = sphi 0, %s33
      %s37 = sphi 0, %s36
      %s53 = sphi 0, %s37
      %s59 = sphi 0, %s61
      %s62 = sphi 0, %s59
      %s63 = sphi 0, %s62
      %s79 = sphi 0, %s63
      %s85 = sphi 0, %s87
      %s88 = sphi 0, %s85
      %s89 = sphi 0, %s88
      %s105 = sphi 0, %s89
      %s111 = sphi 0, %s113
      %s114 = sphi 0, %s111
      %s115 = sphi 0, %s114
      %s131 = sphi 0, %s115
    $region4: #{hgnnp_conv.5} parent=1 // loop_header_branch
      %12 = sbr.rel (%p10) target = $region8
    $region5: #{hgnnp_conv.5} parent=1 // loop_body
      %s14 = ssub.s32 %s9, 1
      %s15 = ssub.s32 %s9, 2
      %s22 = sadd.s32 1, %s17
      %p23 = scmp.ge.s32.totalorder %s22, 3
      %s24 = scalar_select %p23, 0, %s22
      %s25 = sadd.s32 1, %s16
      %s26 = scalar_select %p23, %s25, %s16
      %p27 = scmp.ge.s32.totalorder %s26, 3
      %s28 = scalar_select %p27, 0, %s26
      %s29 = ssub.s32 %s16, %s28
      %s30 = ssub.s32 %s17, %s24
      %s31 = sor.u32 %s29, %s30
      %p32 = scmp.eq.s32.totalorder %s31, 0
      %s34 = sadd.s32 %s33, 1
      %s35 = scalar_select %p32, %s33, %s34
      %p38 = pneg %p32
      %p39 = scmp.eq.s32.totalorder %s9, 8
      %p40 = por %p38, %p39
      %p41 = scmp.ne.s32.totalorder %s33, %s36
      %p42 = scmp.eq.s32.totalorder %s9, 0
      %p43 = por %p41, %p42
      %p44 = scmp.ne.s32.totalorder %s33, %s36
      %p45 = scmp.eq.s32.totalorder %s14, 8
      %p46 = por %p44, %p45
      %p47 = scmp.ne.s32.totalorder %s36, %s37
      %p48 = scmp.eq.s32.totalorder %s14, 0
      %p49 = por %p47, %p48
      %p50 = scmp.ne.s32.totalorder %s36, %s37
      %p51 = scmp.eq.s32.totalorder %s15, 8
      %p52 = por %p50, %p51
      %p54 = scmp.ne.s32.totalorder %s37, %s53
      %p55 = scmp.eq.s32.totalorder %s15, 0
      %p56 = por %p54, %p55
      %s57 = ssub.s32 %s17, %s24
      %p58 = scmp.eq.s32.totalorder %s57, 0
      %s60 = sadd.s32 %s59, 1
      %s61 = scalar_select %p58, %s59, %s60
      %p64 = pneg %p58
      %p65 = scmp.eq.s32.totalorder %s9, 8
      %p66 = por %p64, %p65
      %p67 = scmp.ne.s32.totalorder %s59, %s62
      %p68 = scmp.eq.s32.totalorder %s9, 0
      %p69 = por %p67, %p68
      %p70 = scmp.ne.s32.totalorder %s59, %s62
      %p71 = scmp.eq.s32.totalorder %s14, 8
      %p72 = por %p70, %p71
      %p73 = scmp.ne.s32.totalorder %s62, %s63
      %p74 = scmp.eq.s32.totalorder %s14, 0
      %p75 = por %p73, %p74
      %p76 = scmp.ne.s32.totalorder %s62, %s63
      %p77 = scmp.eq.s32.totalorder %s15, 8
      %p78 = por %p76, %p77
      %p80 = scmp.ne.s32.totalorder %s63, %s79
      %p81 = scmp.eq.s32.totalorder %s15, 0
      %p82 = por %p80, %p81
      %s83 = ssub.s32 %s16, %s28
      %p84 = scmp.eq.s32.totalorder %s83, 0
      %s86 = sadd.s32 %s85, 1
      %s87 = scalar_select %p84, %s85, %s86
      %p90 = pneg %p84
      %p91 = scmp.eq.s32.totalorder %s9, 8
      %p92 = por %p90, %p91
      %p93 = scmp.ne.s32.totalorder %s85, %s88
      %p94 = scmp.eq.s32.totalorder %s9, 0
      %p95 = por %p93, %p94
      %p96 = scmp.ne.s32.totalorder %s85, %s88
      %p97 = scmp.eq.s32.totalorder %s14, 8
      %p98 = por %p96, %p97
      %p99 = scmp.ne.s32.totalorder %s88, %s89
      %p100 = scmp.eq.s32.totalorder %s14, 0
      %p101 = por %p99, %p100
      %p102 = scmp.ne.s32.totalorder %s88, %s89
      %p103 = scmp.eq.s32.totalorder %s15, 8
      %p104 = por %p102, %p103
      %p106 = scmp.ne.s32.totalorder %s89, %s105
      %p107 = scmp.eq.s32.totalorder %s15, 0
      %p108 = por %p106, %p107
      %s109 = ssub.s32 %s16, %s28
      %p110 = scmp.eq.s32.totalorder %s109, 0
      %s112 = sadd.s32 %s111, 1
      %s113 = scalar_select %p110, %s111, %s112
      %p116 = pneg %p110
      %p117 = scmp.eq.s32.totalorder %s9, 8
      %p118 = por %p116, %p117
      %p119 = scmp.ne.s32.totalorder %s111, %s114
      %p120 = scmp.eq.s32.totalorder %s9, 0
      %p121 = por %p119, %p120
      %p122 = scmp.ne.s32.totalorder %s111, %s114
      %p123 = scmp.eq.s32.totalorder %s14, 8
      %p124 = por %p122, %p123
      %p125 = scmp.ne.s32.totalorder %s114, %s115
      %p126 = scmp.eq.s32.totalorder %s14, 0
      %p127 = por %p125, %p126
      %p128 = scmp.ne.s32.totalorder %s114, %s115
      %p129 = scmp.eq.s32.totalorder %s15, 8
      %p130 = por %p128, %p129
      %p132 = scmp.ne.s32.totalorder %s115, %s131
      %p133 = scmp.eq.s32.totalorder %s15, 0
      %p134 = por %p132, %p133
      %p135 = scmp.le.s32.totalorder 1, %s9
      %p136 = scmp.lt.s32.totalorder %s9, 10
      %p137 = pnand %p135, %p136
      %p138 = pneg %p137
      // Predicated region
      $region9: #{hgnnp_conv.5} parent=5 // pred_check
        _
      $region10: #{hgnnp_conv.5} parent=5 // pred_check_branch
        %140 = sbr.rel (%p137) target = $region12
      $region11: #{hgnnp_conv.5} parent=5 // pred_region
        %s141 = ssub.s32 %s9, 1
      $region12: #{hgnnp_conv.5} parent=5 // pred_fallthru
        _
      %p142 = scmp.lt.s32.totalorder %s9, 9
      // Predicated region
      $region13: #{hgnnp_conv.5} parent=5 // pred_check
        %p143 = pneg %p142
      $region14: #{hgnnp_conv.5} parent=5 // pred_check_branch
        %145 = sbr.rel (%p143) target = $region16
      $region15: #{hgnnp_conv.5} parent=5 // pred_region
        // Predicated region
        $region17: #{hgnnp_conv.5} parent=15 // pred_check
          %p146 = pneg %p43
        $region18: #{hgnnp_conv.5} parent=15 // pred_check_branch
          %148 = sbr.rel (%p146) target = $region20
        $region19: #{hgnnp_conv.5} parent=15 // pred_region
          %s149 = sand.u32 %s33, 1
          %s150 = sand.u32 %s33, 1
          %s151 = smul.addr %s150, 64
          %s152 = scalar_lea.vmem [#allocation3], %s151
          %s153 = smul.u32 16, %s16
          %s154 = smul.addr %s153, 3
          %s155 = sadd.s32 %s17, %s154
          %s156 = smul.addr %s155, 4
          %s157 = scalar_lea.vmem %s0, %s156
          // Predicated region
          $region21: #{hgnnp_conv.5} parent=19 // pred_check
            _
          $region22: #{hgnnp_conv.5} parent=19 // pred_check_branch
            %159 = sbr.rel (0) target = $region24
          $region23: #{hgnnp_conv.5} parent=19 // pred_region
            // Predicated region
            $region25: #{hgnnp_conv.5} parent=23 // pred_check
              _
            $region26: #{hgnnp_conv.5} parent=23 // pred_check_branch
              %161 = sbr.rel target = $region28
            $region27: #{hgnnp_conv.5} parent=23 // pred_region
              // Predicated region
              $region40: #{hgnnp_conv.5} parent=27 // pred_check
                _
              $region41: #{hgnnp_conv.5} parent=27 // pred_check_branch
                %207 = sbr.rel (0) target = $region43
              $region42: #{hgnnp_conv.5} parent=27 // pred_region
                loop: start=0, step=1, limit=1
                $region44: #{hgnnp_conv.5} parent=42 // loop_pre_header
                  _
                $region45: #{hgnnp_conv.5} parent=42 // loop_header
                  %s209 = sphi 0, %s213
                  %p210 = scmp.ge.s32.totalorder %s209, 1
                  %s214 = sphi %s157, %s157
                  %s215 = sphi %s152, %s152
                $region46: #{hgnnp_conv.5} parent=42 // loop_header_branch
                  %212 = sbr.rel (%p210) target = $region50
                $region47: #{hgnnp_conv.5} parent=42 // loop_body
                  _
                $region48: #{hgnnp_conv.5} parent=42 // loop_footer
                  %s213 = sadd.s32 1, %s209
                $region49: #{hgnnp_conv.5} parent=42 // loop_footer_branch
                  %208 = sbr.rel target = $region45
                $region50: #{hgnnp_conv.5} parent=42 // loop_exit
                  _
                %s217 = ssub.s32 16, 1
                loop: start=0, step=1, limit=1
                $region51: #{hgnnp_conv.5} parent=42 // loop_pre_header
                  _
                $region52: #{hgnnp_conv.5} parent=42 // loop_header
                  %s219 = sphi 0, %s223
                  %p220 = scmp.ge.s32.totalorder %s219, 1
                  %s224 = sphi %s157, %s157
                  %s225 = sphi %s152, %s152
                $region53: #{hgnnp_conv.5} parent=42 // loop_header_branch
                  %222 = sbr.rel (%p220) target = $region57
                $region54: #{hgnnp_conv.5} parent=42 // loop_body
                  %v226 = vld [vmem:[%s224] sm:%s217]
                  %227 = vst [vmem:[%s225] sm:%s217] %v226
                  %v228 = vld [vmem:[%s224 + $0xc] sm:%s217]
                  %229 = vst [vmem:[%s225 + $0x4] sm:%s217] %v228
                  %v230 = vld [vmem:[%s224 + $0x18] sm:%s217]
                  %231 = vst [vmem:[%s225 + $0x8] sm:%s217] %v230
                  %v232 = vld [vmem:[%s224 + $0x24] sm:%s217]
                  %233 = vst [vmem:[%s225 + $0xc] sm:%s217] %v232
                  %v234 = vld [vmem:[%s224 + $0x30] sm:%s217]
                  %235 = vst [vmem:[%s225 + $0x10] sm:%s217] %v234
                  %v236 = vld [vmem:[%s224 + $0x3c] sm:%s217]
                  %237 = vst [vmem:[%s225 + $0x14] sm:%s217] %v236
                  %v238 = vld [vmem:[%s224 + $0x48] sm:%s217]
                  %239 = vst [vmem:[%s225 + $0x18] sm:%s217] %v238
                  %v240 = vld [vmem:[%s224 + $0x54] sm:%s217]
                  %241 = vst [vmem:[%s225 + $0x1c] sm:%s217] %v240
                  %v242 = vld [vmem:[%s224 + $0x60] sm:%s217]
                  %243 = vst [vmem:[%s225 + $0x20] sm:%s217] %v242
                  %v244 = vld [vmem:[%s224 + $0x6c] sm:%s217]
                  %245 = vst [vmem:[%s225 + $0x24] sm:%s217] %v244
                  %v246 = vld [vmem:[%s224 + $0x78] sm:%s217]
                  %247 = vst [vmem:[%s225 + $0x28] sm:%s217] %v246
                  %v248 = vld [vmem:[%s224 + $0x84] sm:%s217]
                  %249 = vst [vmem:[%s225 + $0x2c] sm:%s217] %v248
                  %v250 = vld [vmem:[%s224 + $0x90] sm:%s217]
                  %251 = vst [vmem:[%s225 + $0x30] sm:%s217] %v250
                  %v252 = vld [vmem:[%s224 + $0x9c] sm:%s217]
                  %253 = vst [vmem:[%s225 + $0x34] sm:%s217] %v252
                  %v254 = vld [vmem:[%s224 + $0xa8] sm:%s217]
                  %255 = vst [vmem:[%s225 + $0x38] sm:%s217] %v254
                  %v256 = vld [vmem:[%s224 + $0xb4] sm:%s217]
                  %257 = vst [vmem:[%s225 + $0x3c] sm:%s217] %v256
                $region55: #{hgnnp_conv.5} parent=42 // loop_footer
                  %s223 = sadd.s32 1, %s219
                $region56: #{hgnnp_conv.5} parent=42 // loop_footer_branch
                  %218 = sbr.rel target = $region52
                $region57: #{hgnnp_conv.5} parent=42 // loop_exit
                  _
              $region43: #{hgnnp_conv.5} parent=27 // pred_fallthru
                _
            $region28: #{hgnnp_conv.5} parent=23 // pred_fallthru
              _
            // Predicated region
            $region29: #{hgnnp_conv.5} parent=23 // pred_check
              _
            $region30: #{hgnnp_conv.5} parent=23 // pred_check_branch
              %163 = sbr.rel (0) target = $region32
            $region31: #{hgnnp_conv.5} parent=23 // pred_region
              %s165 = ssub.s32 16, 1
              loop: start=0, step=1, limit=1
              $region33: #{hgnnp_conv.5} parent=31 // loop_pre_header
                _
              $region34: #{hgnnp_conv.5} parent=31 // loop_header
                %s167 = sphi 0, %s171
                %p168 = scmp.ge.s32.totalorder %s167, 1
                %s172 = sphi %s157, %s157
                %s173 = sphi %s152, %s152
              $region35: #{hgnnp_conv.5} parent=31 // loop_header_branch
                %170 = sbr.rel (%p168) target = $region39
              $region36: #{hgnnp_conv.5} parent=31 // loop_body
                %v174 = vld [vmem:[%s172] sm:%s165]
                %175 = vst [vmem:[%s173] sm:%s165] %v174
                %v176 = vld [vmem:[%s172 + $0xc] sm:%s165]
                %177 = vst [vmem:[%s173 + $0x4] sm:%s165] %v176
                %v178 = vld [vmem:[%s172 + $0x18] sm:%s165]
                %179 = vst [vmem:[%s173 + $0x8] sm:%s165] %v178
                %v180 = vld [vmem:[%s172 + $0x24] sm:%s165]
                %181 = vst [vmem:[%s173 + $0xc] sm:%s165] %v180
                %v182 = vld [vmem:[%s172 + $0x30] sm:%s165]
                %183 = vst [vmem:[%s173 + $0x10] sm:%s165] %v182
                %v184 = vld [vmem:[%s172 + $0x3c] sm:%s165]
                %185 = vst [vmem:[%s173 + $0x14] sm:%s165] %v184
                %v186 = vld [vmem:[%s172 + $0x48] sm:%s165]
                %187 = vst [vmem:[%s173 + $0x18] sm:%s165] %v186
                %v188 = vld [vmem:[%s172 + $0x54] sm:%s165]
                %189 = vst [vmem:[%s173 + $0x1c] sm:%s165] %v188
                %v190 = vld [vmem:[%s172 + $0x60] sm:%s165]
                %191 = vst [vmem:[%s173 + $0x20] sm:%s165] %v190
                %v192 = vld [vmem:[%s172 + $0x6c] sm:%s165]
                %193 = vst [vmem:[%s173 + $0x24] sm:%s165] %v192
                %v194 = vld [vmem:[%s172 + $0x78] sm:%s165]
                %195 = vst [vmem:[%s173 + $0x28] sm:%s165] %v194
                %v196 = vld [vmem:[%s172 + $0x84] sm:%s165]
                %197 = vst [vmem:[%s173 + $0x2c] sm:%s165] %v196
                %v198 = vld [vmem:[%s172 + $0x90] sm:%s165]
                %199 = vst [vmem:[%s173 + $0x30] sm:%s165] %v198
                %v200 = vld [vmem:[%s172 + $0x9c] sm:%s165]
                %201 = vst [vmem:[%s173 + $0x34] sm:%s165] %v200
                %v202 = vld [vmem:[%s172 + $0xa8] sm:%s165]
                %203 = vst [vmem:[%s173 + $0x38] sm:%s165] %v202
                %v204 = vld [vmem:[%s172 + $0xb4] sm:%s165]
                %205 = vst [vmem:[%s173 + $0x3c] sm:%s165] %v204
              $region37: #{hgnnp_conv.5} parent=31 // loop_footer
                %s171 = sadd.s32 1, %s167
              $region38: #{hgnnp_conv.5} parent=31 // loop_footer_branch
                %166 = sbr.rel target = $region34
              $region39: #{hgnnp_conv.5} parent=31 // loop_exit
                _
            $region32: #{hgnnp_conv.5} parent=23 // pred_fallthru
              _
          $region24: #{hgnnp_conv.5} parent=19 // pred_fallthru
            _
          %258 = vnop
        $region20: #{hgnnp_conv.5} parent=15 // pred_fallthru
          _
        // Predicated region
        $region58: #{hgnnp_conv.5} parent=15 // pred_check
          %p259 = pneg %p69
        $region59: #{hgnnp_conv.5} parent=15 // pred_check_branch
          %261 = sbr.rel (%p259) target = $region61
        $region60: #{hgnnp_conv.5} parent=15 // pred_region
          %s262 = smul.u32 16, %s17
          %p263 = scmp.lt.s32.totalorder %s262, 47
          %s264 = scalar_select %p263, %s262, 47
          %s265 = smul.addr %s264, 4
          %s266 = scalar_lea.vmem %s1, %s265
          %s267 = smul.u32 16, %s17
        $region61: #{hgnnp_conv.5} parent=15 // pred_fallthru
          _
        // Predicated region
        $region62: #{hgnnp_conv.5} parent=15 // pred_check
          %p268 = pneg %p95
        $region63: #{hgnnp_conv.5} parent=15 // pred_check_branch
          %270 = sbr.rel (%p268) target = $region65
        $region64: #{hgnnp_conv.5} parent=15 // pred_region
          %s271 = smul.u32 16, %s16
          %p272 = scmp.lt.s32.totalorder %s271, 47
          %s273 = scalar_select %p272, %s271, 47
          %s274 = smul.addr %s273, 8
          %s275 = scalar_lea.vmem %s2, %s274
          %s276 = smul.u32 16, %s16
        $region65: #{hgnnp_conv.5} parent=15 // pred_fallthru
          _
      $region16: #{hgnnp_conv.5} parent=5 // pred_fallthru
        _
      %p277 = scmp.le.s32.totalorder 1, %s9
      %p278 = scmp.lt.s32.totalorder %s9, 10
      %p279 = pnand %p277, %p278
      %p280 = pneg %p279
      // Predicated region
      $region66: #{hgnnp_conv.5} parent=5 // pred_check
        _
      $region67: #{hgnnp_conv.5} parent=5 // pred_check_branch
        %282 = sbr.rel (%p279) target = $region69
      $region68: #{hgnnp_conv.5} parent=5 // pred_region
        %s283 = ssub.s32 %s9, 1
        %s284 = sand.u32 %s36, 1
        %s285 = sand.u32 %s36, 1
        %s286 = smul.addr %s285, 64
        %s287 = scalar_lea.vmem [#allocation3], %s286
        // Predicated region
        $region70: #{hgnnp_conv.5} parent=68 // pred_check
          %p288 = pneg %p49
        $region71: #{hgnnp_conv.5} parent=68 // pred_check_branch
          %290 = sbr.rel (%p288) target = $region73
        $region72: #{hgnnp_conv.5} parent=68 // pred_region
          _
        $region73: #{hgnnp_conv.5} parent=68 // pred_fallthru
          _
        %s291 = sand.u32 %s36, 1
        %s292 = sand.u32 %s36, 1
        %s293 = smul.addr %s292, 64
        %s294 = scalar_lea.vmem [#allocation3], %s293
        %p295 = pneg %p49
        %p296 = pneg %p46
        %s297 = smul.u32 16, %s19
        %p298 = scmp.lt.s32.totalorder %s297, 47
        %s299 = scalar_select %p298, %s297, 47
        %s300 = smul.addr %s299, 4
        %s301 = scalar_lea.vmem %s1, %s300
        %p302 = pneg %p75
        %p303 = pneg %p72
        %s304 = smul.u32 16, %s18
        %p305 = scmp.lt.s32.totalorder %s304, 47
        %s306 = scalar_select %p305, %s304, 47
        %s307 = smul.addr %s306, 8
        %s308 = scalar_lea.vmem %s2, %s307
        %p309 = pneg %p101
        %p310 = pneg %p98
        %p311 = pneg %p127
        %p312 = pneg %p124
        %s313 = smul.u32 16, %s18
        %p314 = scmp.lt.s32.totalorder %s313, 47
        %s315 = scalar_select %p314, %s313, 47
        %s316 = smul.addr %s315, 8
        %s317 = scalar_lea.vmem %s3, %s316
        %s318 = smul.u32 16, %s18
        %s319 = smul.u32 16, %s19
        %p320 = scmp.lt.s32.totalorder %s319, 47
        %s321 = scalar_select %p320, %s319, 47
        %s322 = smul.addr %s321, 4
        %s323 = scalar_lea.vmem %s1, %s322
        %s324 = smul.u32 16, %s19
        %s325 = smul.u32 16, %s18
        %p326 = scmp.lt.s32.totalorder %s325, 47
        %s327 = scalar_select %p326, %s325, 47
        %s328 = smul.addr %s327, 8
        %s329 = scalar_lea.vmem %s2, %s328
        %s330 = smul.u32 16, %s18
        %s331 = smul.u32 16, %s18
        %p332 = scmp.lt.s32.totalorder %s331, 47
        %s333 = scalar_select %p332, %s331, 47
        %s334 = smul.addr %s333, 8
        %s335 = scalar_lea.vmem %s3, %s334
        %s336 = smul.u32 16, %s18
        %v338 = vld [vmem:[%s287] sm:$0xf]
        %v339 = vld [vmem:[%s287 + $0x4] sm:$0xf]
        %v340 = vld [vmem:[%s287 + $0x8] sm:$0xf]
        %v341 = vld [vmem:[%s287 + $0xc] sm:$0xf]
        %v342 = vld [vmem:[%s287 + $0x10] sm:$0xf]
        %v343 = vld [vmem:[%s287 + $0x14] sm:$0xf]
        %v344 = vld [vmem:[%s287 + $0x18] sm:$0xf]
        %v345 = vld [vmem:[%s287 + $0x1c] sm:$0xf]
        %v346 = vld [vmem:[%s287 + $0x20] sm:$0xf]
        %v347 = vld [vmem:[%s287 + $0x24] sm:$0xf]
        %v348 = vld [vmem:[%s287 + $0x28] sm:$0xf]
        %v349 = vld [vmem:[%s287 + $0x2c] sm:$0xf]
        %v350 = vld [vmem:[%s287 + $0x30] sm:$0xf]
        %v351 = vld [vmem:[%s287 + $0x34] sm:$0xf]
        %v352 = vld [vmem:[%s287 + $0x38] sm:$0xf]
        %v353 = vld [vmem:[%s287 + $0x3c] sm:$0xf]
        %v354 = vld [vmem:[%s323] sm:$0xf]
        %v355 = vld [vmem:[%s323 + $0x4] sm:$0xf]
        %v356 = vld [vmem:[%s323 + $0x8] sm:$0xf]
        %v357 = vld [vmem:[%s323 + $0xc] sm:$0xf]
        %v358 = vld [vmem:[%s323 + $0x10] sm:$0xf]
        %v359 = vld [vmem:[%s323 + $0x14] sm:$0xf]
        %v360 = vld [vmem:[%s323 + $0x18] sm:$0xf]
        %v361 = vld [vmem:[%s323 + $0x1c] sm:$0xf]
        %v362 = vld [vmem:[%s323 + $0x20] sm:$0xf]
        %v363 = vld [vmem:[%s323 + $0x24] sm:$0xf]
        %v364 = vld [vmem:[%s323 + $0x28] sm:$0xf]
        %v365 = vld [vmem:[%s323 + $0x2c] sm:$0xf]
        %v366 = vld [vmem:[%s323 + $0x30] sm:$0xf]
        %v367 = vld [vmem:[%s323 + $0x34] sm:$0xf]
        %v368 = vld [vmem:[%s323 + $0x38] sm:$0xf]
        %v369 = vld [vmem:[%s323 + $0x3c] sm:$0xf]
        %v386 = vunpack.c.l.b16 %v338
        %v387 = vunpack.c.l.b16 %v339
        %v388 = vunpack.c.l.b16 %v340
        %v389 = vunpack.c.l.b16 %v341
        %v390 = vunpack.c.l.b16 %v342
        %v391 = vunpack.c.l.b16 %v343
        %v392 = vunpack.c.l.b16 %v344
        %v393 = vunpack.c.l.b16 %v345
        %v394 = vunpack.c.l.b16 %v346
        %v395 = vunpack.c.l.b16 %v347
        %v396 = vunpack.c.l.b16 %v348
        %v397 = vunpack.c.l.b16 %v349
        %v398 = vunpack.c.l.b16 %v350
        %v399 = vunpack.c.l.b16 %v351
        %v400 = vunpack.c.l.b16 %v352
        %v401 = vunpack.c.l.b16 %v353
        %v402 = vpack.c.b16 %v387, %v386
        %v403 = vpack.c.b16 %v389, %v388
        %v404 = vpack.c.b16 %v391, %v390
        %v405 = vpack.c.b16 %v393, %v392
        %v406 = vpack.c.b16 %v395, %v394
        %v407 = vpack.c.b16 %v397, %v396
        %v408 = vpack.c.b16 %v399, %v398
        %v409 = vpack.c.b16 %v401, %v400
        %v434 = vunpack.c.l.b16 %v354
        %v435 = vunpack.c.l.b16 %v355
        %v436 = vunpack.c.l.b16 %v356
        %v437 = vunpack.c.l.b16 %v357
        %v438 = vunpack.c.l.b16 %v358
        %v439 = vunpack.c.l.b16 %v359
        %v440 = vunpack.c.l.b16 %v360
        %v441 = vunpack.c.l.b16 %v361
        %v442 = vunpack.c.l.b16 %v362
        %v443 = vunpack.c.l.b16 %v363
        %v444 = vunpack.c.l.b16 %v364
        %v445 = vunpack.c.l.b16 %v365
        %v446 = vunpack.c.l.b16 %v366
        %v447 = vunpack.c.l.b16 %v367
        %v448 = vunpack.c.l.b16 %v368
        %v449 = vunpack.c.l.b16 %v369
        %v450 = vpack.c.b16 %v435, %v434
        %v451 = vpack.c.b16 %v437, %v436
        %v452 = vpack.c.b16 %v439, %v438
        %v453 = vpack.c.b16 %v441, %v440
        %v454 = vpack.c.b16 %v443, %v442
        %v455 = vpack.c.b16 %v445, %v444
        %v456 = vpack.c.b16 %v447, %v446
        %v457 = vpack.c.b16 %v449, %v448
        %466 = vmatprep.subr.bf16.mxu0 0
        %467 = vmatpush1.bf16.msra.mxu0 %v457
        %468 = vmatprep.subr.bf16.mxu0 0
        %469 = vmatpush1.bf16.msra.mxu0 %v456
        %470 = vmatprep.subr.bf16.mxu0 0
        %471 = vmatpush1.bf16.msra.mxu0 %v455
        %472 = vmatprep.subr.bf16.mxu0 0
        %473 = vmatpush1.bf16.msra.mxu0 %v454
        %474 = vmatprep.subr.bf16.mxu0 0
        %475 = vmatpush1.bf16.msra.mxu0 %v453
        %476 = vmatprep.subr.bf16.mxu0 0
        %477 = vmatpush1.bf16.msra.mxu0 %v452
        %478 = vmatprep.subr.bf16.mxu0 0
        %479 = vmatpush1.bf16.msra.mxu0 %v451
        %480 = vmatprep.subr.bf16.mxu0 0
        %481 = vmatpush1.bf16.msra.mxu0 %v450
        %482 = vmatprep.subr.bf16.mxu0 0
        %483 = vmatpush2.bf16.msra.mxu0 0
        %484 = vmatprep.subr.bf16.mxu0 0
        %485 = vmatpush2.bf16.msra.mxu0 0
        %486 = vmatprep.subr.bf16.mxu0 0
        %487 = vmatpush2.bf16.msra.mxu0 0
        %488 = vmatprep.subr.bf16.mxu0 0
        %489 = vmatpush2.bf16.msra.mxu0 0
        %490 = vmatprep.subr.bf16.mxu0 0
        %491 = vmatpush2.bf16.msra.mxu0 0
        %492 = vmatprep.subr.bf16.mxu0 0
        %493 = vmatpush2.bf16.msra.mxu0 0
        %494 = vmatprep.subr.bf16.mxu0 0
        %495 = vmatpush2.bf16.msra.mxu0 0
        %496 = vmatprep.subr.bf16.mxu0 0
        %497 = vmatpush2.bf16.msra.mxu0 0
        %498 = vmatprep.mubr.bf16.mxu0 0
        %499 = vmatmul.mubr.bf16.gmra.mxu0 %v402
        %v500 = vpop.f32.mrf.mxu0
        %v501 = vadd.f32 0.0, %v500
        %v502 = vpop.f32.mrf.mxu0
        %v503 = vpop.f32.mrf.mxu0
        %v504 = vadd.f32 0.0, %v503
        %v505 = vpop.f32.mrf.mxu0
        %506 = vmatprep.mubr.bf16.mxu0 0
        %507 = vmatmul.mubr.bf16.gmra.mxu0 %v403
        %v508 = vpop.f32.mrf.mxu0
        %v509 = vadd.f32 0.0, %v508
        %v510 = vpop.f32.mrf.mxu0
        %v511 = vpop.f32.mrf.mxu0
        %v512 = vadd.f32 0.0, %v511
        %v513 = vpop.f32.mrf.mxu0
        %514 = vmatprep.mubr.bf16.mxu0 0
        %515 = vmatmul.mubr.bf16.gmra.mxu0 %v404
        %v516 = vpop.f32.mrf.mxu0
        %v517 = vadd.f32 0.0, %v516
        %v518 = vpop.f32.mrf.mxu0
        %v519 = vpop.f32.mrf.mxu0
        %v520 = vadd.f32 0.0, %v519
        %v521 = vpop.f32.mrf.mxu0
        %522 = vmatprep.mubr.bf16.mxu0 0
        %523 = vmatmul.mubr.bf16.gmra.mxu0 %v405
        %v524 = vpop.f32.mrf.mxu0
        %v525 = vadd.f32 0.0, %v524
        %v526 = vpop.f32.mrf.mxu0
        %v527 = vpop.f32.mrf.mxu0
        %v528 = vadd.f32 0.0, %v527
        %v529 = vpop.f32.mrf.mxu0
        %530 = vmatprep.mubr.bf16.mxu0 0
        %531 = vmatmul.mubr.bf16.gmra.mxu0 %v406
        %v532 = vpop.f32.mrf.mxu0
        %v533 = vadd.f32 0.0, %v532
        %v534 = vpop.f32.mrf.mxu0
        %v535 = vpop.f32.mrf.mxu0
        %v536 = vadd.f32 0.0, %v535
        %v537 = vpop.f32.mrf.mxu0
        %538 = vmatprep.mubr.bf16.mxu0 0
        %539 = vmatmul.mubr.bf16.gmra.mxu0 %v407
        %v540 = vpop.f32.mrf.mxu0
        %v541 = vadd.f32 0.0, %v540
        %v542 = vpop.f32.mrf.mxu0
        %v543 = vpop.f32.mrf.mxu0
        %v544 = vadd.f32 0.0, %v543
        %v545 = vpop.f32.mrf.mxu0
        %546 = vmatprep.mubr.bf16.mxu0 0
        %547 = vmatmul.mubr.bf16.gmra.mxu0 %v408
        %v548 = vpop.f32.mrf.mxu0
        %v549 = vadd.f32 0.0, %v548
        %v550 = vpop.f32.mrf.mxu0
        %v551 = vpop.f32.mrf.mxu0
        %v552 = vadd.f32 0.0, %v551
        %v553 = vpop.f32.mrf.mxu0
        %554 = vmatprep.mubr.bf16.mxu0 0
        %555 = vmatmul.mubr.bf16.gmra.mxu0 %v409
        %v556 = vpop.f32.mrf.mxu0
        %v557 = vadd.f32 0.0, %v556
        %v558 = vpop.f32.mrf.mxu0
        %v559 = vpop.f32.mrf.mxu0
        %v560 = vadd.f32 0.0, %v559
        %v561 = vpop.f32.mrf.mxu0
        %562 = vdwg.mxu0
        %p563 = scmp.eq.s32.totalorder %s19, 0
        // Predicated region
        $region74: #{hgnnp_conv.5} parent=68 // pred_check
          %p564 = pneg %p563
        $region75: #{hgnnp_conv.5} parent=68 // pred_check_branch
          %566 = sbr.rel (%p564) target = $region77
        $region76: #{hgnnp_conv.5} parent=68 // pred_region
          %567 = vst [vmem:[#allocation2] sm:$0xff] 0.0
          %568 = vst [vmem:[#allocation2 + $0x8] sm:$0xff] 0.0
          %569 = vst [vmem:[#allocation2 + $0x10] sm:$0xff] 0.0
          %570 = vst [vmem:[#allocation2 + $0x18] sm:$0xff] 0.0
          %571 = vst [vmem:[#allocation2 + $0x20] sm:$0xff] 0.0
          %572 = vst [vmem:[#allocation2 + $0x28] sm:$0xff] 0.0
          %573 = vst [vmem:[#allocation2 + $0x30] sm:$0xff] 0.0
          %574 = vst [vmem:[#allocation2 + $0x38] sm:$0xff] 0.0
          %575 = vst [vmem:[#allocation2 + $0x40] sm:$0xff] 0.0
          %576 = vst [vmem:[#allocation2 + $0x48] sm:$0xff] 0.0
          %577 = vst [vmem:[#allocation2 + $0x50] sm:$0xff] 0.0
          %578 = vst [vmem:[#allocation2 + $0x58] sm:$0xff] 0.0
          %579 = vst [vmem:[#allocation2 + $0x60] sm:$0xff] 0.0
          %580 = vst [vmem:[#allocation2 + $0x68] sm:$0xff] 0.0
          %581 = vst [vmem:[#allocation2 + $0x70] sm:$0xff] 0.0
          %582 = vst [vmem:[#allocation2 + $0x78] sm:$0xff] 0.0
        $region77: #{hgnnp_conv.5} parent=68 // pred_fallthru
          _
        %v583 = vld [vmem:[#allocation2] sm:$0xff]
        %v584 = vld [vmem:[#allocation2 + $0x8] sm:$0xff]
        %v585 = vld [vmem:[#allocation2 + $0x10] sm:$0xff]
        %v586 = vld [vmem:[#allocation2 + $0x18] sm:$0xff]
        %v587 = vld [vmem:[#allocation2 + $0x20] sm:$0xff]
        %v588 = vld [vmem:[#allocation2 + $0x28] sm:$0xff]
        %v589 = vld [vmem:[#allocation2 + $0x30] sm:$0xff]
        %v590 = vld [vmem:[#allocation2 + $0x38] sm:$0xff]
        %v591 = vld [vmem:[#allocation2 + $0x40] sm:$0xff]
        %v592 = vld [vmem:[#allocation2 + $0x48] sm:$0xff]
        %v593 = vld [vmem:[#allocation2 + $0x50] sm:$0xff]
        %v594 = vld [vmem:[#allocation2 + $0x58] sm:$0xff]
        %v595 = vld [vmem:[#allocation2 + $0x60] sm:$0xff]
        %v596 = vld [vmem:[#allocation2 + $0x68] sm:$0xff]
        %v597 = vld [vmem:[#allocation2 + $0x70] sm:$0xff]
        %v598 = vld [vmem:[#allocation2 + $0x78] sm:$0xff]
        %v599 = vadd.f32 %v583, %v501
        %v600 = vadd.f32 %v584, %v504
        %v601 = vadd.f32 %v585, %v509
        %v602 = vadd.f32 %v586, %v512
        %v603 = vadd.f32 %v587, %v517
        %v604 = vadd.f32 %v588, %v520
        %v605 = vadd.f32 %v589, %v525
        %v606 = vadd.f32 %v590, %v528
        %v607 = vadd.f32 %v591, %v533
        %v608 = vadd.f32 %v592, %v536
        %v609 = vadd.f32 %v593, %v541
        %v610 = vadd.f32 %v594, %v544
        %v611 = vadd.f32 %v595, %v549
        %v612 = vadd.f32 %v596, %v552
        %v613 = vadd.f32 %v597, %v557
        %v614 = vadd.f32 %v598, %v560
        %615 = vst [vmem:[#allocation2] sm:$0xff] %v599
        %616 = vst [vmem:[#allocation2 + $0x8] sm:$0xff] %v600
        %617 = vst [vmem:[#allocation2 + $0x10] sm:$0xff] %v601
        %618 = vst [vmem:[#allocation2 + $0x18] sm:$0xff] %v602
        %619 = vst [vmem:[#allocation2 + $0x20] sm:$0xff] %v603
        %620 = vst [vmem:[#allocation2 + $0x28] sm:$0xff] %v604
        %621 = vst [vmem:[#allocation2 + $0x30] sm:$0xff] %v605
        %622 = vst [vmem:[#allocation2 + $0x38] sm:$0xff] %v606
        %623 = vst [vmem:[#allocation2 + $0x40] sm:$0xff] %v607
        %624 = vst [vmem:[#allocation2 + $0x48] sm:$0xff] %v608
        %625 = vst [vmem:[#allocation2 + $0x50] sm:$0xff] %v609
        %626 = vst [vmem:[#allocation2 + $0x58] sm:$0xff] %v610
        %627 = vst [vmem:[#allocation2 + $0x60] sm:$0xff] %v611
        %628 = vst [vmem:[#allocation2 + $0x68] sm:$0xff] %v612
        %629 = vst [vmem:[#allocation2 + $0x70] sm:$0xff] %v613
        %630 = vst [vmem:[#allocation2 + $0x78] sm:$0xff] %v614
        %p631 = scmp.eq.s32.totalorder %s19, 2
        // Predicated region
        $region78: #{hgnnp_conv.5} parent=68 // pred_check
          %p632 = pneg %p631
        $region79: #{hgnnp_conv.5} parent=68 // pred_check_branch
          %634 = sbr.rel (%p632) target = $region81
        $region80: #{hgnnp_conv.5} parent=68 // pred_region
          %v635 = vld [vmem:[#allocation2] sm:$0xff]
          %v636 = vld [vmem:[#allocation2 + $0x8] sm:$0xff]
          %v637 = vld [vmem:[#allocation2 + $0x10] sm:$0xff]
          %v638 = vld [vmem:[#allocation2 + $0x18] sm:$0xff]
          %v639 = vld [vmem:[#allocation2 + $0x20] sm:$0xff]
          %v640 = vld [vmem:[#allocation2 + $0x28] sm:$0xff]
          %v641 = vld [vmem:[#allocation2 + $0x30] sm:$0xff]
          %v642 = vld [vmem:[#allocation2 + $0x38] sm:$0xff]
          %v643 = vld [vmem:[#allocation2 + $0x40] sm:$0xff]
          %v644 = vld [vmem:[#allocation2 + $0x48] sm:$0xff]
          %v645 = vld [vmem:[#allocation2 + $0x50] sm:$0xff]
          %v646 = vld [vmem:[#allocation2 + $0x58] sm:$0xff]
          %v647 = vld [vmem:[#allocation2 + $0x60] sm:$0xff]
          %v648 = vld [vmem:[#allocation2 + $0x68] sm:$0xff]
          %v649 = vld [vmem:[#allocation2 + $0x70] sm:$0xff]
          %v650 = vld [vmem:[#allocation2 + $0x78] sm:$0xff]
          %v651 = vld [vmem:[%s329] sm:$0xff]
          %v652 = vld [vmem:[%s329 + $0x8] sm:$0xff]
          %v653 = vld [vmem:[%s329 + $0x10] sm:$0xff]
          %v654 = vld [vmem:[%s329 + $0x18] sm:$0xff]
          %v655 = vld [vmem:[%s329 + $0x20] sm:$0xff]
          %v656 = vld [vmem:[%s329 + $0x28] sm:$0xff]
          %v657 = vld [vmem:[%s329 + $0x30] sm:$0xff]
          %v658 = vld [vmem:[%s329 + $0x38] sm:$0xff]
          %v659 = vld [vmem:[%s329 + $0x40] sm:$0xff]
          %v660 = vld [vmem:[%s329 + $0x48] sm:$0xff]
          %v661 = vld [vmem:[%s329 + $0x50] sm:$0xff]
          %v662 = vld [vmem:[%s329 + $0x58] sm:$0xff]
          %v663 = vld [vmem:[%s329 + $0x60] sm:$0xff]
          %v664 = vld [vmem:[%s329 + $0x68] sm:$0xff]
          %v665 = vld [vmem:[%s329 + $0x70] sm:$0xff]
          %v666 = vld [vmem:[%s329 + $0x78] sm:$0xff]
          %668 = vset.pattern.permute.xlu0 0
          %669 = vperm.xlu0 %668, %v651
          %v670 = vpop.permute.xlu0 %669
          %673 = vset.pattern.permute.xlu0 0
          %674 = vperm.xlu0 %673, %v652
          %v675 = vpop.permute.xlu0 %674
          %678 = vset.pattern.permute.xlu0 0
          %679 = vperm.xlu0 %678, %v653
          %v680 = vpop.permute.xlu0 %679
          %683 = vset.pattern.permute.xlu0 0
          %684 = vperm.xlu0 %683, %v654
          %v685 = vpop.permute.xlu0 %684
          %688 = vset.pattern.permute.xlu0 0
          %689 = vperm.xlu0 %688, %v655
          %v690 = vpop.permute.xlu0 %689
          %693 = vset.pattern.permute.xlu0 0
          %694 = vperm.xlu0 %693, %v656
          %v695 = vpop.permute.xlu0 %694
          %698 = vset.pattern.permute.xlu0 0
          %699 = vperm.xlu0 %698, %v657
          %v700 = vpop.permute.xlu0 %699
          %703 = vset.pattern.permute.xlu0 0
          %704 = vperm.xlu0 %703, %v658
          %v705 = vpop.permute.xlu0 %704
          %708 = vset.pattern.permute.xlu0 0
          %709 = vperm.xlu0 %708, %v659
          %v710 = vpop.permute.xlu0 %709
          %713 = vset.pattern.permute.xlu0 0
          %714 = vperm.xlu0 %713, %v660
          %v715 = vpop.permute.xlu0 %714
          %718 = vset.pattern.permute.xlu0 0
          %719 = vperm.xlu0 %718, %v661
          %v720 = vpop.permute.xlu0 %719
          %723 = vset.pattern.permute.xlu0 0
          %724 = vperm.xlu0 %723, %v662
          %v725 = vpop.permute.xlu0 %724
          %728 = vset.pattern.permute.xlu0 0
          %729 = vperm.xlu0 %728, %v663
          %v730 = vpop.permute.xlu0 %729
          %733 = vset.pattern.permute.xlu0 0
          %734 = vperm.xlu0 %733, %v664
          %v735 = vpop.permute.xlu0 %734
          %738 = vset.pattern.permute.xlu0 0
          %739 = vperm.xlu0 %738, %v665
          %v740 = vpop.permute.xlu0 %739
          %743 = vset.pattern.permute.xlu0 0
          %744 = vperm.xlu0 %743, %v666
          %v745 = vpop.permute.xlu0 %744
          %v747 = vmul.f32 %v635, %v670
          %v748 = vmul.f32 %v636, %v675
          %v749 = vmul.f32 %v637, %v680
          %v750 = vmul.f32 %v638, %v685
          %v751 = vmul.f32 %v639, %v690
          %v752 = vmul.f32 %v640, %v695
          %v753 = vmul.f32 %v641, %v700
          %v754 = vmul.f32 %v642, %v705
          %v755 = vmul.f32 %v643, %v710
          %v756 = vmul.f32 %v644, %v715
          %v757 = vmul.f32 %v645, %v720
          %v758 = vmul.f32 %v646, %v725
          %v759 = vmul.f32 %v647, %v730
          %v760 = vmul.f32 %v648, %v735
          %v761 = vmul.f32 %v649, %v740
          %v762 = vmul.f32 %v650, %v745
          %v763 = vmax.f32 %v747, 0.0
          %v764 = vmax.f32 %v748, 0.0
          %v765 = vmax.f32 %v749, 0.0
          %v766 = vmax.f32 %v750, 0.0
          %v767 = vmax.f32 %v751, 0.0
          %v768 = vmax.f32 %v752, 0.0
          %v769 = vmax.f32 %v753, 0.0
          %v770 = vmax.f32 %v754, 0.0
          %v771 = vmax.f32 %v755, 0.0
          %v772 = vmax.f32 %v756, 0.0
          %v773 = vmax.f32 %v757, 0.0
          %v774 = vmax.f32 %v758, 0.0
          %v775 = vmax.f32 %v759, 0.0
          %v776 = vmax.f32 %v760, 0.0
          %v777 = vmax.f32 %v761, 0.0
          %v778 = vmax.f32 %v762, 0.0
          %779 = vst [vmem:[%s335] sm:$0xff] %v763
          %780 = vst [vmem:[%s335 + $0x8] sm:$0xff] %v764
          %781 = vst [vmem:[%s335 + $0x10] sm:$0xff] %v765
          %782 = vst [vmem:[%s335 + $0x18] sm:$0xff] %v766
          %783 = vst [vmem:[%s335 + $0x20] sm:$0xff] %v767
          %784 = vst [vmem:[%s335 + $0x28] sm:$0xff] %v768
          %785 = vst [vmem:[%s335 + $0x30] sm:$0xff] %v769
          %786 = vst [vmem:[%s335 + $0x38] sm:$0xff] %v770
          %787 = vst [vmem:[%s335 + $0x40] sm:$0xff] %v771
          %788 = vst [vmem:[%s335 + $0x48] sm:$0xff] %v772
          %789 = vst [vmem:[%s335 + $0x50] sm:$0xff] %v773
          %790 = vst [vmem:[%s335 + $0x58] sm:$0xff] %v774
          %791 = vst [vmem:[%s335 + $0x60] sm:$0xff] %v775
          %792 = vst [vmem:[%s335 + $0x68] sm:$0xff] %v776
          %793 = vst [vmem:[%s335 + $0x70] sm:$0xff] %v777
          %794 = vst [vmem:[%s335 + $0x78] sm:$0xff] %v778
        $region81: #{hgnnp_conv.5} parent=68 // pred_fallthru
          _
        %s795 = smul.u32 16, %s18
        %p796 = scmp.lt.s32.totalorder %s795, 47
        %s797 = scalar_select %p796, %s795, 47
        %s798 = smul.addr %s797, 8
        %s799 = scalar_lea.vmem %s3, %s798
        // Predicated region
        $region82: #{hgnnp_conv.5} parent=68 // pred_check
          %p800 = pneg %p124
        $region83: #{hgnnp_conv.5} parent=68 // pred_check_branch
          %802 = sbr.rel (%p800) target = $region85
        $region84: #{hgnnp_conv.5} parent=68 // pred_region
          %s803 = smul.u32 16, %s18
        $region85: #{hgnnp_conv.5} parent=68 // pred_fallthru
          _
      $region69: #{hgnnp_conv.5} parent=5 // pred_fallthru
        _
      %p804 = scmp.le.s32.totalorder 2, %s9
      // Predicated region
      $region86: #{hgnnp_conv.5} parent=5 // pred_check
        %p805 = pneg %p804
      $region87: #{hgnnp_conv.5} parent=5 // pred_check_branch
        %807 = sbr.rel (%p805) target = $region89
      $region88: #{hgnnp_conv.5} parent=5 // pred_region
        %s808 = ssub.s32 %s9, 2
        // Predicated region
        $region90: #{hgnnp_conv.5} parent=88 // pred_check
          %p809 = pneg %p130
        $region91: #{hgnnp_conv.5} parent=88 // pred_check_branch
          %811 = sbr.rel (%p809) target = $region93
        $region92: #{hgnnp_conv.5} parent=88 // pred_region
          %s812 = smul.u32 16, %s20
          %p813 = scmp.lt.s32.totalorder %s812, 47
          %s814 = scalar_select %p813, %s812, 47
          %s815 = smul.addr %s814, 8
          %s816 = scalar_lea.vmem %s3, %s815
        $region93: #{hgnnp_conv.5} parent=88 // pred_fallthru
          _
      $region89: #{hgnnp_conv.5} parent=5 // pred_fallthru
        _
    $region6: #{hgnnp_conv.5} parent=1 // loop_footer
      %s13 = sadd.s32 1, %s9
    $region7: #{hgnnp_conv.5} parent=1 // loop_footer_branch
      %8 = sbr.rel target = $region3
    $region8: #{hgnnp_conv.5} parent=1 // loop_exit
      _

// kernel: hgnnp_conv.4
$region0: #{hgnnp_conv.4}
  #allocation0 [shape = 'u32[]', space=smem, size = 0x4, offset = 0x4, fixed_abs, tag = 'smem constant byte address 0x4 - core index']
  #allocation1 [shape = 'u32[144,128]{1,0:T(1,128)}', space=vmem, size = 0x12000, scoped, tag = 'internal scratch']
  #allocation2 [shape = 'f32[128,128]{1,0:T(8,128)}', space=vmem, size = 0x10000, scoped, tag = 'scratch operand']
  %s0 = inlined_call_operand.vmem [shape: bf16[384,384], index: 0, kind: input, shape index: {}]
  %s1 = inlined_call_operand.vmem [shape: bf16[384,128], index: 1, kind: input, shape index: {}]
  %s2 = inlined_call_operand.vmem [shape: f32[384,1], index: 2, kind: input, shape index: {}]
  %s3 = inlined_call_operand.vmem [shape: bf16[384,128], index: 3, kind: output, shape index: {}]
  %s4 = sld [smem:[#allocation0]]
  $region94: #{hgnnp_conv.4} parent=0
    _
  %s6 = ssub.s32 1, %s4
  %s7 = scalar_select 0, %s6, %s4
  $region1: #{hgnnp_conv.4} parent=0
    #allocation3 [shape = 'u8[65536]{0}', space=vmem, size = 0x10000, scoped, tag = 'input window, operand 0']
    loop: start=0, step=1, limit=11
    $region2: #{hgnnp_conv.4} parent=1 // loop_pre_header
      _
    $region3: #{hgnnp_conv.4} parent=1 // loop_header
      %s9 = sphi 0, %s13
      %p10 = scmp.ge.s32.totalorder %s9, 11
      %s16 = sphi 0, %s28
      %s17 = sphi 0, %s24
      %s18 = sphi 0, %s16
      %s19 = sphi 0, %s17
      %s20 = sphi 0, %s18
      %s21 = sphi 0, %s19
      %s33 = sphi 0, %s35
      %s36 = sphi 0, %s33
      %s37 = sphi 0, %s36
      %s53 = sphi 0, %s37
      %s59 = sphi 0, %s61
      %s62 = sphi 0, %s59
      %s63 = sphi 0, %s62
      %s79 = sphi 0, %s63
      %s85 = sphi 0, %s87
      %s88 = sphi 0, %s85
      %s89 = sphi 0, %s88
      %s105 = sphi 0, %s89
      %s111 = sphi 0, %s113
      %s114 = sphi 0, %s111
      %s115 = sphi 0, %s114
      %s131 = sphi 0, %s115
    $region4: #{hgnnp_conv.4} parent=1 // loop_header_branch
      %12 = sbr.rel (%p10) target = $region8
    $region5: #{hgnnp_conv.4} parent=1 // loop_body
      %s14 = ssub.s32 %s9, 1
      %s15 = ssub.s32 %s9, 2
      %s22 = sadd.s32 1, %s17
      %p23 = scmp.ge.s32.totalorder %s22, 3
      %s24 = scalar_select %p23, 0, %s22
      %s25 = sadd.s32 1, %s16
      %s26 = scalar_select %p23, %s25, %s16
      %p27 = scmp.ge.s32.totalorder %s26, 3
      %s28 = scalar_select %p27, 0, %s26
      %s29 = ssub.s32 %s17, %s24
      %s30 = ssub.s32 %s16, %s28
      %s31 = sor.u32 %s29, %s30
      %p32 = scmp.eq.s32.totalorder %s31, 0
      %s34 = sadd.s32 %s33, 1
      %s35 = scalar_select %p32, %s33, %s34
      %p38 = pneg %p32
      %p39 = scmp.eq.s32.totalorder %s9, 8
      %p40 = por %p38, %p39
      %p41 = scmp.ne.s32.totalorder %s33, %s36
      %p42 = scmp.eq.s32.totalorder %s9, 0
      %p43 = por %p41, %p42
      %p44 = scmp.ne.s32.totalorder %s33, %s36
      %p45 = scmp.eq.s32.totalorder %s14, 8
      %p46 = por %p44, %p45
      %p47 = scmp.ne.s32.totalorder %s36, %s37
      %p48 = scmp.eq.s32.totalorder %s14, 0
      %p49 = por %p47, %p48
      %p50 = scmp.ne.s32.totalorder %s36, %s37
      %p51 = scmp.eq.s32.totalorder %s15, 8
      %p52 = por %p50, %p51
      %p54 = scmp.ne.s32.totalorder %s37, %s53
      %p55 = scmp.eq.s32.totalorder %s15, 0
      %p56 = por %p54, %p55
      %s57 = ssub.s32 %s17, %s24
      %p58 = scmp.eq.s32.totalorder %s57, 0
      %s60 = sadd.s32 %s59, 1
      %s61 = scalar_select %p58, %s59, %s60
      %p64 = pneg %p58
      %p65 = scmp.eq.s32.totalorder %s9, 8
      %p66 = por %p64, %p65
      %p67 = scmp.ne.s32.totalorder %s59, %s62
      %p68 = scmp.eq.s32.totalorder %s9, 0
      %p69 = por %p67, %p68
      %p70 = scmp.ne.s32.totalorder %s59, %s62
      %p71 = scmp.eq.s32.totalorder %s14, 8
      %p72 = por %p70, %p71
      %p73 = scmp.ne.s32.totalorder %s62, %s63
      %p74 = scmp.eq.s32.totalorder %s14, 0
      %p75 = por %p73, %p74
      %p76 = scmp.ne.s32.totalorder %s62, %s63
      %p77 = scmp.eq.s32.totalorder %s15, 8
      %p78 = por %p76, %p77
      %p80 = scmp.ne.s32.totalorder %s63, %s79
      %p81 = scmp.eq.s32.totalorder %s15, 0
      %p82 = por %p80, %p81
      %s83 = ssub.s32 %s16, %s28
      %p84 = scmp.eq.s32.totalorder %s83, 0
      %s86 = sadd.s32 %s85, 1
      %s87 = scalar_select %p84, %s85, %s86
      %p90 = pneg %p84
      %p91 = scmp.eq.s32.totalorder %s9, 8
      %p92 = por %p90, %p91
      %p93 = scmp.ne.s32.totalorder %s85, %s88
      %p94 = scmp.eq.s32.totalorder %s9, 0
      %p95 = por %p93, %p94
      %p96 = scmp.ne.s32.totalorder %s85, %s88
      %p97 = scmp.eq.s32.totalorder %s14, 8
      %p98 = por %p96, %p97
      %p99 = scmp.ne.s32.totalorder %s88, %s89
      %p100 = scmp.eq.s32.totalorder %s14, 0
      %p101 = por %p99, %p100
      %p102 = scmp.ne.s32.totalorder %s88, %s89
      %p103 = scmp.eq.s32.totalorder %s15, 8
      %p104 = por %p102, %p103
      %p106 = scmp.ne.s32.totalorder %s89, %s105
      %p107 = scmp.eq.s32.totalorder %s15, 0
      %p108 = por %p106, %p107
      %s109 = ssub.s32 %s16, %s28
      %p110 = scmp.eq.s32.totalorder %s109, 0
      %s112 = sadd.s32 %s111, 1
      %s113 = scalar_select %p110, %s111, %s112
      %p116 = pneg %p110
      %p117 = scmp.eq.s32.totalorder %s9, 8
      %p118 = por %p116, %p117
      %p119 = scmp.ne.s32.totalorder %s111, %s114
      %p120 = scmp.eq.s32.totalorder %s9, 0
      %p121 = por %p119, %p120
      %p122 = scmp.ne.s32.totalorder %s111, %s114
      %p123 = scmp.eq.s32.totalorder %s14, 8
      %p124 = por %p122, %p123
      %p125 = scmp.ne.s32.totalorder %s114, %s115
      %p126 = scmp.eq.s32.totalorder %s14, 0
      %p127 = por %p125, %p126
      %p128 = scmp.ne.s32.totalorder %s114, %s115
      %p129 = scmp.eq.s32.totalorder %s15, 8
      %p130 = por %p128, %p129
      %p132 = scmp.ne.s32.totalorder %s115, %s131
      %p133 = scmp.eq.s32.totalorder %s15, 0
      %p134 = por %p132, %p133
      %p135 = scmp.le.s32.totalorder 1, %s9
      %p136 = scmp.lt.s32.totalorder %s9, 10
      %p137 = pnand %p135, %p136
      %p138 = pneg %p137
      // Predicated region
      $region9: #{hgnnp_conv.4} parent=5 // pred_check
        _
      $region10: #{hgnnp_conv.4} parent=5 // pred_check_branch
        %140 = sbr.rel (%p137) target = $region12
      $region11: #{hgnnp_conv.4} parent=5 // pred_region
        %s141 = ssub.s32 %s9, 1
      $region12: #{hgnnp_conv.4} parent=5 // pred_fallthru
        _
      %p142 = scmp.lt.s32.totalorder %s9, 9
      // Predicated region
      $region13: #{hgnnp_conv.4} parent=5 // pred_check
        %p143 = pneg %p142
      $region14: #{hgnnp_conv.4} parent=5 // pred_check_branch
        %145 = sbr.rel (%p143) target = $region16
      $region15: #{hgnnp_conv.4} parent=5 // pred_region
        // Predicated region
        $region17: #{hgnnp_conv.4} parent=15 // pred_check
          %p146 = pneg %p43
        $region18: #{hgnnp_conv.4} parent=15 // pred_check_branch
          %148 = sbr.rel (%p146) target = $region20
        $region19: #{hgnnp_conv.4} parent=15 // pred_region
          %s149 = sand.u32 %s33, 1
          %s150 = sand.u32 %s33, 1
          %s151 = smul.addr %s150, 64
          %s152 = scalar_lea.vmem [#allocation3], %s151
          %s153 = smul.u32 16, %s17
          %s154 = smul.addr %s153, 3
          %s155 = sadd.s32 %s16, %s154
          %s156 = smul.addr %s155, 4
          %s157 = scalar_lea.vmem %s0, %s156
          // Predicated region
          $region21: #{hgnnp_conv.4} parent=19 // pred_check
            _
          $region22: #{hgnnp_conv.4} parent=19 // pred_check_branch
            %159 = sbr.rel (0) target = $region24
          $region23: #{hgnnp_conv.4} parent=19 // pred_region
            // Predicated region
            $region25: #{hgnnp_conv.4} parent=23 // pred_check
              _
            $region26: #{hgnnp_conv.4} parent=23 // pred_check_branch
              %161 = sbr.rel target = $region28
            $region27: #{hgnnp_conv.4} parent=23 // pred_region
              // Predicated region
              $region40: #{hgnnp_conv.4} parent=27 // pred_check
                _
              $region41: #{hgnnp_conv.4} parent=27 // pred_check_branch
                %207 = sbr.rel (0) target = $region43
              $region42: #{hgnnp_conv.4} parent=27 // pred_region
                loop: start=0, step=1, limit=1
                $region44: #{hgnnp_conv.4} parent=42 // loop_pre_header
                  _
                $region45: #{hgnnp_conv.4} parent=42 // loop_header
                  %s209 = sphi 0, %s213
                  %p210 = scmp.ge.s32.totalorder %s209, 1
                  %s214 = sphi %s157, %s157
                  %s215 = sphi %s152, %s152
                $region46: #{hgnnp_conv.4} parent=42 // loop_header_branch
                  %212 = sbr.rel (%p210) target = $region50
                $region47: #{hgnnp_conv.4} parent=42 // loop_body
                  _
                $region48: #{hgnnp_conv.4} parent=42 // loop_footer
                  %s213 = sadd.s32 1, %s209
                $region49: #{hgnnp_conv.4} parent=42 // loop_footer_branch
                  %208 = sbr.rel target = $region45
                $region50: #{hgnnp_conv.4} parent=42 // loop_exit
                  _
                %s217 = ssub.s32 16, 1
                loop: start=0, step=1, limit=1
                $region51: #{hgnnp_conv.4} parent=42 // loop_pre_header
                  _
                $region52: #{hgnnp_conv.4} parent=42 // loop_header
                  %s219 = sphi 0, %s223
                  %p220 = scmp.ge.s32.totalorder %s219, 1
                  %s224 = sphi %s157, %s157
                  %s225 = sphi %s152, %s152
                $region53: #{hgnnp_conv.4} parent=42 // loop_header_branch
                  %222 = sbr.rel (%p220) target = $region57
                $region54: #{hgnnp_conv.4} parent=42 // loop_body
                  %v226 = vld [vmem:[%s224] sm:%s217]
                  %227 = vst [vmem:[%s225] sm:%s217] %v226
                  %v228 = vld [vmem:[%s224 + $0xc] sm:%s217]
                  %229 = vst [vmem:[%s225 + $0x4] sm:%s217] %v228
                  %v230 = vld [vmem:[%s224 + $0x18] sm:%s217]
                  %231 = vst [vmem:[%s225 + $0x8] sm:%s217] %v230
                  %v232 = vld [vmem:[%s224 + $0x24] sm:%s217]
                  %233 = vst [vmem:[%s225 + $0xc] sm:%s217] %v232
                  %v234 = vld [vmem:[%s224 + $0x30] sm:%s217]
                  %235 = vst [vmem:[%s225 + $0x10] sm:%s217] %v234
                  %v236 = vld [vmem:[%s224 + $0x3c] sm:%s217]
                  %237 = vst [vmem:[%s225 + $0x14] sm:%s217] %v236
                  %v238 = vld [vmem:[%s224 + $0x48] sm:%s217]
                  %239 = vst [vmem:[%s225 + $0x18] sm:%s217] %v238
                  %v240 = vld [vmem:[%s224 + $0x54] sm:%s217]
                  %241 = vst [vmem:[%s225 + $0x1c] sm:%s217] %v240
                  %v242 = vld [vmem:[%s224 + $0x60] sm:%s217]
                  %243 = vst [vmem:[%s225 + $0x20] sm:%s217] %v242
                  %v244 = vld [vmem:[%s224 + $0x6c] sm:%s217]
                  %245 = vst [vmem:[%s225 + $0x24] sm:%s217] %v244
                  %v246 = vld [vmem:[%s224 + $0x78] sm:%s217]
                  %247 = vst [vmem:[%s225 + $0x28] sm:%s217] %v246
                  %v248 = vld [vmem:[%s224 + $0x84] sm:%s217]
                  %249 = vst [vmem:[%s225 + $0x2c] sm:%s217] %v248
                  %v250 = vld [vmem:[%s224 + $0x90] sm:%s217]
                  %251 = vst [vmem:[%s225 + $0x30] sm:%s217] %v250
                  %v252 = vld [vmem:[%s224 + $0x9c] sm:%s217]
                  %253 = vst [vmem:[%s225 + $0x34] sm:%s217] %v252
                  %v254 = vld [vmem:[%s224 + $0xa8] sm:%s217]
                  %255 = vst [vmem:[%s225 + $0x38] sm:%s217] %v254
                  %v256 = vld [vmem:[%s224 + $0xb4] sm:%s217]
                  %257 = vst [vmem:[%s225 + $0x3c] sm:%s217] %v256
                $region55: #{hgnnp_conv.4} parent=42 // loop_footer
                  %s223 = sadd.s32 1, %s219
                $region56: #{hgnnp_conv.4} parent=42 // loop_footer_branch
                  %218 = sbr.rel target = $region52
                $region57: #{hgnnp_conv.4} parent=42 // loop_exit
                  _
              $region43: #{hgnnp_conv.4} parent=27 // pred_fallthru
                _
            $region28: #{hgnnp_conv.4} parent=23 // pred_fallthru
              _
            // Predicated region
            $region29: #{hgnnp_conv.4} parent=23 // pred_check
              _
            $region30: #{hgnnp_conv.4} parent=23 // pred_check_branch
              %163 = sbr.rel (0) target = $region32
            $region31: #{hgnnp_conv.4} parent=23 // pred_region
              %s165 = ssub.s32 16, 1
              loop: start=0, step=1, limit=1
              $region33: #{hgnnp_conv.4} parent=31 // loop_pre_header
                _
              $region34: #{hgnnp_conv.4} parent=31 // loop_header
                %s167 = sphi 0, %s171
                %p168 = scmp.ge.s32.totalorder %s167, 1
                %s172 = sphi %s157, %s157
                %s173 = sphi %s152, %s152
              $region35: #{hgnnp_conv.4} parent=31 // loop_header_branch
                %170 = sbr.rel (%p168) target = $region39
              $region36: #{hgnnp_conv.4} parent=31 // loop_body
                %v174 = vld [vmem:[%s172] sm:%s165]
                %175 = vst [vmem:[%s173] sm:%s165] %v174
                %v176 = vld [vmem:[%s172 + $0xc] sm:%s165]
                %177 = vst [vmem:[%s173 + $0x4] sm:%s165] %v176
                %v178 = vld [vmem:[%s172 + $0x18] sm:%s165]
                %179 = vst [vmem:[%s173 + $0x8] sm:%s165] %v178
                %v180 = vld [vmem:[%s172 + $0x24] sm:%s165]
                %181 = vst [vmem:[%s173 + $0xc] sm:%s165] %v180
                %v182 = vld [vmem:[%s172 + $0x30] sm:%s165]
                %183 = vst [vmem:[%s173 + $0x10] sm:%s165] %v182
                %v184 = vld [vmem:[%s172 + $0x3c] sm:%s165]
                %185 = vst [vmem:[%s173 + $0x14] sm:%s165] %v184
                %v186 = vld [vmem:[%s172 + $0x48] sm:%s165]
                %187 = vst [vmem:[%s173 + $0x18] sm:%s165] %v186
                %v188 = vld [vmem:[%s172 + $0x54] sm:%s165]
                %189 = vst [vmem:[%s173 + $0x1c] sm:%s165] %v188
                %v190 = vld [vmem:[%s172 + $0x60] sm:%s165]
                %191 = vst [vmem:[%s173 + $0x20] sm:%s165] %v190
                %v192 = vld [vmem:[%s172 + $0x6c] sm:%s165]
                %193 = vst [vmem:[%s173 + $0x24] sm:%s165] %v192
                %v194 = vld [vmem:[%s172 + $0x78] sm:%s165]
                %195 = vst [vmem:[%s173 + $0x28] sm:%s165] %v194
                %v196 = vld [vmem:[%s172 + $0x84] sm:%s165]
                %197 = vst [vmem:[%s173 + $0x2c] sm:%s165] %v196
                %v198 = vld [vmem:[%s172 + $0x90] sm:%s165]
                %199 = vst [vmem:[%s173 + $0x30] sm:%s165] %v198
                %v200 = vld [vmem:[%s172 + $0x9c] sm:%s165]
                %201 = vst [vmem:[%s173 + $0x34] sm:%s165] %v200
                %v202 = vld [vmem:[%s172 + $0xa8] sm:%s165]
                %203 = vst [vmem:[%s173 + $0x38] sm:%s165] %v202
                %v204 = vld [vmem:[%s172 + $0xb4] sm:%s165]
                %205 = vst [vmem:[%s173 + $0x3c] sm:%s165] %v204
              $region37: #{hgnnp_conv.4} parent=31 // loop_footer
                %s171 = sadd.s32 1, %s167
              $region38: #{hgnnp_conv.4} parent=31 // loop_footer_branch
                %166 = sbr.rel target = $region34
              $region39: #{hgnnp_conv.4} parent=31 // loop_exit
                _
            $region32: #{hgnnp_conv.4} parent=23 // pred_fallthru
              _
          $region24: #{hgnnp_conv.4} parent=19 // pred_fallthru
            _
          %258 = vnop
        $region20: #{hgnnp_conv.4} parent=15 // pred_fallthru
          _
        // Predicated region
        $region58: #{hgnnp_conv.4} parent=15 // pred_check
          %p259 = pneg %p69
        $region59: #{hgnnp_conv.4} parent=15 // pred_check_branch
          %261 = sbr.rel (%p259) target = $region61
        $region60: #{hgnnp_conv.4} parent=15 // pred_region
          %s262 = smul.u32 16, %s17
          %p263 = scmp.lt.s32.totalorder %s262, 47
          %s264 = scalar_select %p263, %s262, 47
          %s265 = smul.addr %s264, 4
          %s266 = scalar_lea.vmem %s1, %s265
          %s267 = smul.u32 16, %s17
        $region61: #{hgnnp_conv.4} parent=15 // pred_fallthru
          _
        // Predicated region
        $region62: #{hgnnp_conv.4} parent=15 // pred_check
          %p268 = pneg %p95
        $region63: #{hgnnp_conv.4} parent=15 // pred_check_branch
          %270 = sbr.rel (%p268) target = $region65
        $region64: #{hgnnp_conv.4} parent=15 // pred_region
          %s271 = smul.u32 16, %s16
          %p272 = scmp.lt.s32.totalorder %s271, 47
          %s273 = scalar_select %p272, %s271, 47
          %s274 = smul.addr %s273, 8
          %s275 = scalar_lea.vmem %s2, %s274
          %s276 = smul.u32 16, %s16
        $region65: #{hgnnp_conv.4} parent=15 // pred_fallthru
          _
      $region16: #{hgnnp_conv.4} parent=5 // pred_fallthru
        _
      %p277 = scmp.le.s32.totalorder 1, %s9
      %p278 = scmp.lt.s32.totalorder %s9, 10
      %p279 = pnand %p277, %p278
      %p280 = pneg %p279
      // Predicated region
      $region66: #{hgnnp_conv.4} parent=5 // pred_check
        _
      $region67: #{hgnnp_conv.4} parent=5 // pred_check_branch
        %282 = sbr.rel (%p279) target = $region69
      $region68: #{hgnnp_conv.4} parent=5 // pred_region
        %s283 = ssub.s32 %s9, 1
        %s284 = sand.u32 %s36, 1
        %s285 = sand.u32 %s36, 1
        %s286 = smul.addr %s285, 64
        %s287 = scalar_lea.vmem [#allocation3], %s286
        // Predicated region
        $region70: #{hgnnp_conv.4} parent=68 // pred_check
          %p288 = pneg %p49
        $region71: #{hgnnp_conv.4} parent=68 // pred_check_branch
          %290 = sbr.rel (%p288) target = $region73
        $region72: #{hgnnp_conv.4} parent=68 // pred_region
          _
        $region73: #{hgnnp_conv.4} parent=68 // pred_fallthru
          _
        %s291 = sand.u32 %s36, 1
        %s292 = sand.u32 %s36, 1
        %s293 = smul.addr %s292, 64
        %s294 = scalar_lea.vmem [#allocation3], %s293
        %p295 = pneg %p49
        %p296 = pneg %p46
        %s297 = smul.u32 16, %s19
        %p298 = scmp.lt.s32.totalorder %s297, 47
        %s299 = scalar_select %p298, %s297, 47
        %s300 = smul.addr %s299, 4
        %s301 = scalar_lea.vmem %s1, %s300
        %p302 = pneg %p75
        %p303 = pneg %p72
        %s304 = smul.u32 16, %s18
        %p305 = scmp.lt.s32.totalorder %s304, 47
        %s306 = scalar_select %p305, %s304, 47
        %s307 = smul.addr %s306, 8
        %s308 = scalar_lea.vmem %s2, %s307
        %p309 = pneg %p101
        %p310 = pneg %p98
        %p311 = pneg %p127
        %p312 = pneg %p124
        %s313 = smul.u32 16, %s18
        %p314 = scmp.lt.s32.totalorder %s313, 47
        %s315 = scalar_select %p314, %s313, 47
        %s316 = smul.addr %s315, 4
        %s317 = scalar_lea.vmem %s3, %s316
        %s318 = smul.u32 16, %s19
        %s319 = smul.u32 16, %s19
        %p320 = scmp.lt.s32.totalorder %s319, 47
        %s321 = scalar_select %p320, %s319, 47
        %s322 = smul.addr %s321, 4
        %s323 = scalar_lea.vmem %s1, %s322
        %s324 = smul.u32 16, %s19
        %s325 = smul.u32 16, %s18
        %p326 = scmp.lt.s32.totalorder %s325, 47
        %s327 = scalar_select %p326, %s325, 47
        %s328 = smul.addr %s327, 8
        %s329 = scalar_lea.vmem %s2, %s328
        %s330 = smul.u32 16, %s18
        %s331 = smul.u32 16, %s18
        %p332 = scmp.lt.s32.totalorder %s331, 47
        %s333 = scalar_select %p332, %s331, 47
        %s334 = smul.addr %s333, 4
        %s335 = scalar_lea.vmem %s3, %s334
        %s336 = smul.u32 16, %s18
        %v338 = vld [vmem:[%s287] sm:$0xf]
        %v339 = vld [vmem:[%s287 + $0x4] sm:$0xf]
        %v340 = vld [vmem:[%s287 + $0x8] sm:$0xf]
        %v341 = vld [vmem:[%s287 + $0xc] sm:$0xf]
        %v342 = vld [vmem:[%s287 + $0x10] sm:$0xf]
        %v343 = vld [vmem:[%s287 + $0x14] sm:$0xf]
        %v344 = vld [vmem:[%s287 + $0x18] sm:$0xf]
        %v345 = vld [vmem:[%s287 + $0x1c] sm:$0xf]
        %v346 = vld [vmem:[%s287 + $0x20] sm:$0xf]
        %v347 = vld [vmem:[%s287 + $0x24] sm:$0xf]
        %v348 = vld [vmem:[%s287 + $0x28] sm:$0xf]
        %v349 = vld [vmem:[%s287 + $0x2c] sm:$0xf]
        %v350 = vld [vmem:[%s287 + $0x30] sm:$0xf]
        %v351 = vld [vmem:[%s287 + $0x34] sm:$0xf]
        %v352 = vld [vmem:[%s287 + $0x38] sm:$0xf]
        %v353 = vld [vmem:[%s287 + $0x3c] sm:$0xf]
        %v354 = vld [vmem:[%s323] sm:$0xf]
        %v355 = vld [vmem:[%s323 + $0x4] sm:$0xf]
        %v356 = vld [vmem:[%s323 + $0x8] sm:$0xf]
        %v357 = vld [vmem:[%s323 + $0xc] sm:$0xf]
        %v358 = vld [vmem:[%s323 + $0x10] sm:$0xf]
        %v359 = vld [vmem:[%s323 + $0x14] sm:$0xf]
        %v360 = vld [vmem:[%s323 + $0x18] sm:$0xf]
        %v361 = vld [vmem:[%s323 + $0x1c] sm:$0xf]
        %v362 = vld [vmem:[%s323 + $0x20] sm:$0xf]
        %v363 = vld [vmem:[%s323 + $0x24] sm:$0xf]
        %v364 = vld [vmem:[%s323 + $0x28] sm:$0xf]
        %v365 = vld [vmem:[%s323 + $0x2c] sm:$0xf]
        %v366 = vld [vmem:[%s323 + $0x30] sm:$0xf]
        %v367 = vld [vmem:[%s323 + $0x34] sm:$0xf]
        %v368 = vld [vmem:[%s323 + $0x38] sm:$0xf]
        %v369 = vld [vmem:[%s323 + $0x3c] sm:$0xf]
        %v386 = vunpack.c.l.b16 %v338
        %v387 = vunpack.c.l.b16 %v339
        %v388 = vunpack.c.l.b16 %v340
        %v389 = vunpack.c.l.b16 %v341
        %v390 = vunpack.c.l.b16 %v342
        %v391 = vunpack.c.l.b16 %v343
        %v392 = vunpack.c.l.b16 %v344
        %v393 = vunpack.c.l.b16 %v345
        %v394 = vunpack.c.l.b16 %v346
        %v395 = vunpack.c.l.b16 %v347
        %v396 = vunpack.c.l.b16 %v348
        %v397 = vunpack.c.l.b16 %v349
        %v398 = vunpack.c.l.b16 %v350
        %v399 = vunpack.c.l.b16 %v351
        %v400 = vunpack.c.l.b16 %v352
        %v401 = vunpack.c.l.b16 %v353
        %v402 = vpack.c.b16 %v387, %v386
        %v403 = vpack.c.b16 %v389, %v388
        %v404 = vpack.c.b16 %v391, %v390
        %v405 = vpack.c.b16 %v393, %v392
        %v406 = vpack.c.b16 %v395, %v394
        %v407 = vpack.c.b16 %v397, %v396
        %v408 = vpack.c.b16 %v399, %v398
        %v409 = vpack.c.b16 %v401, %v400
        %418 = vxpose.xlu0.c.b16.start [1/8] %v402, 128
        %419 = vxpose.xlu0.c.b16.cont [2/8] %v403, 128
        %420 = vxpose.xlu0.c.b16.cont [3/8] %v404, 128
        %421 = vxpose.xlu0.c.b16.cont [4/8] %v405, 128
        %422 = vxpose.xlu0.c.b16.cont [5/8] %v406, 128
        %423 = vxpose.xlu0.c.b16.cont [6/8] %v407, 128
        %424 = vxpose.xlu0.c.b16.cont [7/8] %v408, 128
        %425 = vxpose.xlu0.c.b16.end [8/8] %v409, 128
        %v426 = vpop.trf.xlu0
        %v427 = vpop.trf.xlu0
        %v428 = vpop.trf.xlu0
        %v429 = vpop.trf.xlu0
        %v430 = vpop.trf.xlu0
        %v431 = vpop.trf.xlu0
        %v432 = vpop.trf.xlu0
        %v433 = vpop.trf.xlu0
        %v450 = vunpack.c.l.b16 %v354
        %v451 = vunpack.c.l.b16 %v355
        %v452 = vunpack.c.l.b16 %v356
        %v453 = vunpack.c.l.b16 %v357
        %v454 = vunpack.c.l.b16 %v358
        %v455 = vunpack.c.l.b16 %v359
        %v456 = vunpack.c.l.b16 %v360
        %v457 = vunpack.c.l.b16 %v361
        %v458 = vunpack.c.l.b16 %v362
        %v459 = vunpack.c.l.b16 %v363
        %v460 = vunpack.c.l.b16 %v364
        %v461 = vunpack.c.l.b16 %v365
        %v462 = vunpack.c.l.b16 %v366
        %v463 = vunpack.c.l.b16 %v367
        %v464 = vunpack.c.l.b16 %v368
        %v465 = vunpack.c.l.b16 %v369
        %v466 = vpack.c.b16 %v451, %v450
        %v467 = vpack.c.b16 %v453, %v452
        %v468 = vpack.c.b16 %v455, %v454
        %v469 = vpack.c.b16 %v457, %v456
        %v470 = vpack.c.b16 %v459, %v458
        %v471 = vpack.c.b16 %v461, %v460
        %v472 = vpack.c.b16 %v463, %v462
        %v473 = vpack.c.b16 %v465, %v464
        %482 = vmatprep.subr.bf16.mxu0 0
        %483 = vmatpush1.bf16.msra.mxu0 %v473
        %484 = vmatprep.subr.bf16.mxu0 0
        %485 = vmatpush1.bf16.msra.mxu0 %v472
        %486 = vmatprep.subr.bf16.mxu0 0
        %487 = vmatpush1.bf16.msra.mxu0 %v471
        %488 = vmatprep.subr.bf16.mxu0 0
        %489 = vmatpush1.bf16.msra.mxu0 %v470
        %490 = vmatprep.subr.bf16.mxu0 0
        %491 = vmatpush1.bf16.msra.mxu0 %v469
        %492 = vmatprep.subr.bf16.mxu0 0
        %493 = vmatpush1.bf16.msra.mxu0 %v468
        %494 = vmatprep.subr.bf16.mxu0 0
        %495 = vmatpush1.bf16.msra.mxu0 %v467
        %496 = vmatprep.subr.bf16.mxu0 0
        %497 = vmatpush1.bf16.msra.mxu0 %v466
        %498 = vmatprep.subr.bf16.mxu0 0
        %499 = vmatpush2.bf16.msra.mxu0 0
        %500 = vmatprep.subr.bf16.mxu0 0
        %501 = vmatpush2.bf16.msra.mxu0 0
        %502 = vmatprep.subr.bf16.mxu0 0
        %503 = vmatpush2.bf16.msra.mxu0 0
        %504 = vmatprep.subr.bf16.mxu0 0
        %505 = vmatpush2.bf16.msra.mxu0 0
        %506 = vmatprep.subr.bf16.mxu0 0
        %507 = vmatpush2.bf16.msra.mxu0 0
        %508 = vmatprep.subr.bf16.mxu0 0
        %509 = vmatpush2.bf16.msra.mxu0 0
        %510 = vmatprep.subr.bf16.mxu0 0
        %511 = vmatpush2.bf16.msra.mxu0 0
        %512 = vmatprep.subr.bf16.mxu0 0
        %513 = vmatpush2.bf16.msra.mxu0 0
        %514 = vmatprep.mubr.bf16.mxu0 0
        %515 = vmatmul.mubr.bf16.gmra.mxu0 %v426
        %v516 = vpop.f32.mrf.mxu0
        %v517 = vadd.f32 0.0, %v516
        %v518 = vpop.f32.mrf.mxu0
        %v519 = vpop.f32.mrf.mxu0
        %v520 = vadd.f32 0.0, %v519
        %v521 = vpop.f32.mrf.mxu0
        %522 = vmatprep.mubr.bf16.mxu0 0
        %523 = vmatmul.mubr.bf16.gmra.mxu0 %v427
        %v524 = vpop.f32.mrf.mxu0
        %v525 = vadd.f32 0.0, %v524
        %v526 = vpop.f32.mrf.mxu0
        %v527 = vpop.f32.mrf.mxu0
        %v528 = vadd.f32 0.0, %v527
        %v529 = vpop.f32.mrf.mxu0
        %530 = vmatprep.mubr.bf16.mxu0 0
        %531 = vmatmul.mubr.bf16.gmra.mxu0 %v428
        %v532 = vpop.f32.mrf.mxu0
        %v533 = vadd.f32 0.0, %v532
        %v534 = vpop.f32.mrf.mxu0
        %v535 = vpop.f32.mrf.mxu0
        %v536 = vadd.f32 0.0, %v535
        %v537 = vpop.f32.mrf.mxu0
        %538 = vmatprep.mubr.bf16.mxu0 0
        %539 = vmatmul.mubr.bf16.gmra.mxu0 %v429
        %v540 = vpop.f32.mrf.mxu0
        %v541 = vadd.f32 0.0, %v540
        %v542 = vpop.f32.mrf.mxu0
        %v543 = vpop.f32.mrf.mxu0
        %v544 = vadd.f32 0.0, %v543
        %v545 = vpop.f32.mrf.mxu0
        %546 = vmatprep.mubr.bf16.mxu0 0
        %547 = vmatmul.mubr.bf16.gmra.mxu0 %v430
        %v548 = vpop.f32.mrf.mxu0
        %v549 = vadd.f32 0.0, %v548
        %v550 = vpop.f32.mrf.mxu0
        %v551 = vpop.f32.mrf.mxu0
        %v552 = vadd.f32 0.0, %v551
        %v553 = vpop.f32.mrf.mxu0
        %554 = vmatprep.mubr.bf16.mxu0 0
        %555 = vmatmul.mubr.bf16.gmra.mxu0 %v431
        %v556 = vpop.f32.mrf.mxu0
        %v557 = vadd.f32 0.0, %v556
        %v558 = vpop.f32.mrf.mxu0
        %v559 = vpop.f32.mrf.mxu0
        %v560 = vadd.f32 0.0, %v559
        %v561 = vpop.f32.mrf.mxu0
        %562 = vmatprep.mubr.bf16.mxu0 0
        %563 = vmatmul.mubr.bf16.gmra.mxu0 %v432
        %v564 = vpop.f32.mrf.mxu0
        %v565 = vadd.f32 0.0, %v564
        %v566 = vpop.f32.mrf.mxu0
        %v567 = vpop.f32.mrf.mxu0
        %v568 = vadd.f32 0.0, %v567
        %v569 = vpop.f32.mrf.mxu0
        %570 = vmatprep.mubr.bf16.mxu0 0
        %571 = vmatmul.mubr.bf16.gmra.mxu0 %v433
        %v572 = vpop.f32.mrf.mxu0
        %v573 = vadd.f32 0.0, %v572
        %v574 = vpop.f32.mrf.mxu0
        %v575 = vpop.f32.mrf.mxu0
        %v576 = vadd.f32 0.0, %v575
        %v577 = vpop.f32.mrf.mxu0
        %578 = vdwg.mxu0
        %p579 = scmp.eq.s32.totalorder %s19, 0
        // Predicated region
        $region74: #{hgnnp_conv.4} parent=68 // pred_check
          %p580 = pneg %p579
        $region75: #{hgnnp_conv.4} parent=68 // pred_check_branch
          %582 = sbr.rel (%p580) target = $region77
        $region76: #{hgnnp_conv.4} parent=68 // pred_region
          %583 = vst [vmem:[#allocation2] sm:$0xff] 0.0
          %584 = vst [vmem:[#allocation2 + $0x8] sm:$0xff] 0.0
          %585 = vst [vmem:[#allocation2 + $0x10] sm:$0xff] 0.0
          %586 = vst [vmem:[#allocation2 + $0x18] sm:$0xff] 0.0
          %587 = vst [vmem:[#allocation2 + $0x20] sm:$0xff] 0.0
          %588 = vst [vmem:[#allocation2 + $0x28] sm:$0xff] 0.0
          %589 = vst [vmem:[#allocation2 + $0x30] sm:$0xff] 0.0
          %590 = vst [vmem:[#allocation2 + $0x38] sm:$0xff] 0.0
          %591 = vst [vmem:[#allocation2 + $0x40] sm:$0xff] 0.0
          %592 = vst [vmem:[#allocation2 + $0x48] sm:$0xff] 0.0
          %593 = vst [vmem:[#allocation2 + $0x50] sm:$0xff] 0.0
          %594 = vst [vmem:[#allocation2 + $0x58] sm:$0xff] 0.0
          %595 = vst [vmem:[#allocation2 + $0x60] sm:$0xff] 0.0
          %596 = vst [vmem:[#allocation2 + $0x68] sm:$0xff] 0.0
          %597 = vst [vmem:[#allocation2 + $0x70] sm:$0xff] 0.0
          %598 = vst [vmem:[#allocation2 + $0x78] sm:$0xff] 0.0
        $region77: #{hgnnp_conv.4} parent=68 // pred_fallthru
          _
        %v599 = vld [vmem:[#allocation2] sm:$0xff]
        %v600 = vld [vmem:[#allocation2 + $0x8] sm:$0xff]
        %v601 = vld [vmem:[#allocation2 + $0x10] sm:$0xff]
        %v602 = vld [vmem:[#allocation2 + $0x18] sm:$0xff]
        %v603 = vld [vmem:[#allocation2 + $0x20] sm:$0xff]
        %v604 = vld [vmem:[#allocation2 + $0x28] sm:$0xff]
        %v605 = vld [vmem:[#allocation2 + $0x30] sm:$0xff]
        %v606 = vld [vmem:[#allocation2 + $0x38] sm:$0xff]
        %v607 = vld [vmem:[#allocation2 + $0x40] sm:$0xff]
        %v608 = vld [vmem:[#allocation2 + $0x48] sm:$0xff]
        %v609 = vld [vmem:[#allocation2 + $0x50] sm:$0xff]
        %v610 = vld [vmem:[#allocation2 + $0x58] sm:$0xff]
        %v611 = vld [vmem:[#allocation2 + $0x60] sm:$0xff]
        %v612 = vld [vmem:[#allocation2 + $0x68] sm:$0xff]
        %v613 = vld [vmem:[#allocation2 + $0x70] sm:$0xff]
        %v614 = vld [vmem:[#allocation2 + $0x78] sm:$0xff]
        %v615 = vadd.f32 %v599, %v517
        %v616 = vadd.f32 %v600, %v520
        %v617 = vadd.f32 %v601, %v525
        %v618 = vadd.f32 %v602, %v528
        %v619 = vadd.f32 %v603, %v533
        %v620 = vadd.f32 %v604, %v536
        %v621 = vadd.f32 %v605, %v541
        %v622 = vadd.f32 %v606, %v544
        %v623 = vadd.f32 %v607, %v549
        %v624 = vadd.f32 %v608, %v552
        %v625 = vadd.f32 %v609, %v557
        %v626 = vadd.f32 %v610, %v560
        %v627 = vadd.f32 %v611, %v565
        %v628 = vadd.f32 %v612, %v568
        %v629 = vadd.f32 %v613, %v573
        %v630 = vadd.f32 %v614, %v576
        %631 = vst [vmem:[#allocation2] sm:$0xff] %v615
        %632 = vst [vmem:[#allocation2 + $0x8] sm:$0xff] %v616
        %633 = vst [vmem:[#allocation2 + $0x10] sm:$0xff] %v617
        %634 = vst [vmem:[#allocation2 + $0x18] sm:$0xff] %v618
        %635 = vst [vmem:[#allocation2 + $0x20] sm:$0xff] %v619
        %636 = vst [vmem:[#allocation2 + $0x28] sm:$0xff] %v620
        %637 = vst [vmem:[#allocation2 + $0x30] sm:$0xff] %v621
        %638 = vst [vmem:[#allocation2 + $0x38] sm:$0xff] %v622
        %639 = vst [vmem:[#allocation2 + $0x40] sm:$0xff] %v623
        %640 = vst [vmem:[#allocation2 + $0x48] sm:$0xff] %v624
        %641 = vst [vmem:[#allocation2 + $0x50] sm:$0xff] %v625
        %642 = vst [vmem:[#allocation2 + $0x58] sm:$0xff] %v626
        %643 = vst [vmem:[#allocation2 + $0x60] sm:$0xff] %v627
        %644 = vst [vmem:[#allocation2 + $0x68] sm:$0xff] %v628
        %645 = vst [vmem:[#allocation2 + $0x70] sm:$0xff] %v629
        %646 = vst [vmem:[#allocation2 + $0x78] sm:$0xff] %v630
        %p647 = scmp.eq.s32.totalorder %s19, 2
        // Predicated region
        $region78: #{hgnnp_conv.4} parent=68 // pred_check
          %p648 = pneg %p647
        $region79: #{hgnnp_conv.4} parent=68 // pred_check_branch
          %650 = sbr.rel (%p648) target = $region81
        $region80: #{hgnnp_conv.4} parent=68 // pred_region
          %v651 = vld [vmem:[#allocation2] sm:$0xff]
          %v652 = vld [vmem:[#allocation2 + $0x8] sm:$0xff]
          %v653 = vld [vmem:[#allocation2 + $0x10] sm:$0xff]
          %v654 = vld [vmem:[#allocation2 + $0x18] sm:$0xff]
          %v655 = vld [vmem:[#allocation2 + $0x20] sm:$0xff]
          %v656 = vld [vmem:[#allocation2 + $0x28] sm:$0xff]
          %v657 = vld [vmem:[#allocation2 + $0x30] sm:$0xff]
          %v658 = vld [vmem:[#allocation2 + $0x38] sm:$0xff]
          %v659 = vld [vmem:[#allocation2 + $0x40] sm:$0xff]
          %v660 = vld [vmem:[#allocation2 + $0x48] sm:$0xff]
          %v661 = vld [vmem:[#allocation2 + $0x50] sm:$0xff]
          %v662 = vld [vmem:[#allocation2 + $0x58] sm:$0xff]
          %v663 = vld [vmem:[#allocation2 + $0x60] sm:$0xff]
          %v664 = vld [vmem:[#allocation2 + $0x68] sm:$0xff]
          %v665 = vld [vmem:[#allocation2 + $0x70] sm:$0xff]
          %v666 = vld [vmem:[#allocation2 + $0x78] sm:$0xff]
          %v667 = vld [vmem:[%s329] sm:$0xff]
          %v668 = vld [vmem:[%s329 + $0x8] sm:$0xff]
          %v669 = vld [vmem:[%s329 + $0x10] sm:$0xff]
          %v670 = vld [vmem:[%s329 + $0x18] sm:$0xff]
          %v671 = vld [vmem:[%s329 + $0x20] sm:$0xff]
          %v672 = vld [vmem:[%s329 + $0x28] sm:$0xff]
          %v673 = vld [vmem:[%s329 + $0x30] sm:$0xff]
          %v674 = vld [vmem:[%s329 + $0x38] sm:$0xff]
          %v675 = vld [vmem:[%s329 + $0x40] sm:$0xff]
          %v676 = vld [vmem:[%s329 + $0x48] sm:$0xff]
          %v677 = vld [vmem:[%s329 + $0x50] sm:$0xff]
          %v678 = vld [vmem:[%s329 + $0x58] sm:$0xff]
          %v679 = vld [vmem:[%s329 + $0x60] sm:$0xff]
          %v680 = vld [vmem:[%s329 + $0x68] sm:$0xff]
          %v681 = vld [vmem:[%s329 + $0x70] sm:$0xff]
          %v682 = vld [vmem:[%s329 + $0x78] sm:$0xff]
          %684 = vset.pattern.permute.xlu0 0
          %685 = vperm.xlu0 %684, %v667
          %v686 = vpop.permute.xlu0 %685
          %689 = vset.pattern.permute.xlu0 0
          %690 = vperm.xlu0 %689, %v668
          %v691 = vpop.permute.xlu0 %690
          %694 = vset.pattern.permute.xlu0 0
          %695 = vperm.xlu0 %694, %v669
          %v696 = vpop.permute.xlu0 %695
          %699 = vset.pattern.permute.xlu0 0
          %700 = vperm.xlu0 %699, %v670
          %v701 = vpop.permute.xlu0 %700
          %704 = vset.pattern.permute.xlu0 0
          %705 = vperm.xlu0 %704, %v671
          %v706 = vpop.permute.xlu0 %705
          %709 = vset.pattern.permute.xlu0 0
          %710 = vperm.xlu0 %709, %v672
          %v711 = vpop.permute.xlu0 %710
          %714 = vset.pattern.permute.xlu0 0
          %715 = vperm.xlu0 %714, %v673
          %v716 = vpop.permute.xlu0 %715
          %719 = vset.pattern.permute.xlu0 0
          %720 = vperm.xlu0 %719, %v674
          %v721 = vpop.permute.xlu0 %720
          %724 = vset.pattern.permute.xlu0 0
          %725 = vperm.xlu0 %724, %v675
          %v726 = vpop.permute.xlu0 %725
          %729 = vset.pattern.permute.xlu0 0
          %730 = vperm.xlu0 %729, %v676
          %v731 = vpop.permute.xlu0 %730
          %734 = vset.pattern.permute.xlu0 0
          %735 = vperm.xlu0 %734, %v677
          %v736 = vpop.permute.xlu0 %735
          %739 = vset.pattern.permute.xlu0 0
          %740 = vperm.xlu0 %739, %v678
          %v741 = vpop.permute.xlu0 %740
          %744 = vset.pattern.permute.xlu0 0
          %745 = vperm.xlu0 %744, %v679
          %v746 = vpop.permute.xlu0 %745
          %749 = vset.pattern.permute.xlu0 0
          %750 = vperm.xlu0 %749, %v680
          %v751 = vpop.permute.xlu0 %750
          %754 = vset.pattern.permute.xlu0 0
          %755 = vperm.xlu0 %754, %v681
          %v756 = vpop.permute.xlu0 %755
          %759 = vset.pattern.permute.xlu0 0
          %760 = vperm.xlu0 %759, %v682
          %v761 = vpop.permute.xlu0 %760
          %v763 = vmul.f32 %v651, %v686
          %v764 = vmul.f32 %v652, %v691
          %v765 = vmul.f32 %v653, %v696
          %v766 = vmul.f32 %v654, %v701
          %v767 = vmul.f32 %v655, %v706
          %v768 = vmul.f32 %v656, %v711
          %v769 = vmul.f32 %v657, %v716
          %v770 = vmul.f32 %v658, %v721
          %v771 = vmul.f32 %v659, %v726
          %v772 = vmul.f32 %v660, %v731
          %v773 = vmul.f32 %v661, %v736
          %v774 = vmul.f32 %v662, %v741
          %v775 = vmul.f32 %v663, %v746
          %v776 = vmul.f32 %v664, %v751
          %v777 = vmul.f32 %v665, %v756
          %v778 = vmul.f32 %v666, %v761
          %v779 = vpack.c.bf16 %v764, %v763
          %v780 = vpack.c.bf16 %v766, %v765
          %v781 = vpack.c.bf16 %v768, %v767
          %v782 = vpack.c.bf16 %v770, %v769
          %v783 = vpack.c.bf16 %v772, %v771
          %v784 = vpack.c.bf16 %v774, %v773
          %v785 = vpack.c.bf16 %v776, %v775
          %v786 = vpack.c.bf16 %v778, %v777
          %v795 = vunpack.c.l.b16 %v779
          %v796 = vunpack.c.h.b16 %v779
          %v797 = vunpack.c.l.b16 %v780
          %v798 = vunpack.c.h.b16 %v780
          %v799 = vunpack.c.l.b16 %v781
          %v800 = vunpack.c.h.b16 %v781
          %v801 = vunpack.c.l.b16 %v782
          %v802 = vunpack.c.h.b16 %v782
          %v803 = vunpack.c.l.b16 %v783
          %v804 = vunpack.c.h.b16 %v783
          %v805 = vunpack.c.l.b16 %v784
          %v806 = vunpack.c.h.b16 %v784
          %v807 = vunpack.c.l.b16 %v785
          %v808 = vunpack.c.h.b16 %v785
          %v809 = vunpack.c.l.b16 %v786
          %v810 = vunpack.c.h.b16 %v786
          %v811 = vpack.c.b16 %v795, %v795
          %v812 = vpack.c.b16 %v796, %v796
          %v813 = vpack.c.b16 %v797, %v797
          %v814 = vpack.c.b16 %v798, %v798
          %v815 = vpack.c.b16 %v799, %v799
          %v816 = vpack.c.b16 %v800, %v800
          %v817 = vpack.c.b16 %v801, %v801
          %v818 = vpack.c.b16 %v802, %v802
          %v819 = vpack.c.b16 %v803, %v803
          %v820 = vpack.c.b16 %v804, %v804
          %v821 = vpack.c.b16 %v805, %v805
          %v822 = vpack.c.b16 %v806, %v806
          %v823 = vpack.c.b16 %v807, %v807
          %v824 = vpack.c.b16 %v808, %v808
          %v825 = vpack.c.b16 %v809, %v809
          %v826 = vpack.c.b16 %v810, %v810
          %843 = vst [vmem:[%s335] sm:$0xf] %v811
          %844 = vst [vmem:[%s335 + $0x4] sm:$0xf] %v812
          %845 = vst [vmem:[%s335 + $0x8] sm:$0xf] %v813
          %846 = vst [vmem:[%s335 + $0xc] sm:$0xf] %v814
          %847 = vst [vmem:[%s335 + $0x10] sm:$0xf] %v815
          %848 = vst [vmem:[%s335 + $0x14] sm:$0xf] %v816
          %849 = vst [vmem:[%s335 + $0x18] sm:$0xf] %v817
          %850 = vst [vmem:[%s335 + $0x1c] sm:$0xf] %v818
          %851 = vst [vmem:[%s335 + $0x20] sm:$0xf] %v819
          %852 = vst [vmem:[%s335 + $0x24] sm:$0xf] %v820
          %853 = vst [vmem:[%s335 + $0x28] sm:$0xf] %v821
          %854 = vst [vmem:[%s335 + $0x2c] sm:$0xf] %v822
          %855 = vst [vmem:[%s335 + $0x30] sm:$0xf] %v823
          %856 = vst [vmem:[%s335 + $0x34] sm:$0xf] %v824
          %857 = vst [vmem:[%s335 + $0x38] sm:$0xf] %v825
          %858 = vst [vmem:[%s335 + $0x3c] sm:$0xf] %v826
        $region81: #{hgnnp_conv.4} parent=68 // pred_fallthru
          _
        %s859 = smul.u32 16, %s18
        %p860 = scmp.lt.s32.totalorder %s859, 47
        %s861 = scalar_select %p860, %s859, 47
        %s862 = smul.addr %s861, 4
        %s863 = scalar_lea.vmem %s3, %s862
        // Predicated region
        $region82: #{hgnnp_conv.4} parent=68 // pred_check
          %p864 = pneg %p124
        $region83: #{hgnnp_conv.4} parent=68 // pred_check_branch
          %866 = sbr.rel (%p864) target = $region85
        $region84: #{hgnnp_conv.4} parent=68 // pred_region
          %s867 = smul.u32 16, %s18
        $region85: #{hgnnp_conv.4} parent=68 // pred_fallthru
          _
      $region69: #{hgnnp_conv.4} parent=5 // pred_fallthru
        _
      %p868 = scmp.le.s32.totalorder 2, %s9
      // Predicated region
      $region86: #{hgnnp_conv.4} parent=5 // pred_check
        %p869 = pneg %p868
      $region87: #{hgnnp_conv.4} parent=5 // pred_check_branch
        %871 = sbr.rel (%p869) target = $region89
      $region88: #{hgnnp_conv.4} parent=5 // pred_region
        %s872 = ssub.s32 %s9, 2
        // Predicated region
        $region90: #{hgnnp_conv.4} parent=88 // pred_check
          %p873 = pneg %p130
        $region91: #{hgnnp_conv.4} parent=88 // pred_check_branch
          %875 = sbr.rel (%p873) target = $region93
        $region92: #{hgnnp_conv.4} parent=88 // pred_region
          %s876 = smul.u32 16, %s20
          %p877 = scmp.lt.s32.totalorder %s876, 47
          %s878 = scalar_select %p877, %s876, 47
          %s879 = smul.addr %s878, 4
          %s880 = scalar_lea.vmem %s3, %s879
        $region93: #{hgnnp_conv.4} parent=88 // pred_fallthru
          _
      $region89: #{hgnnp_conv.4} parent=5 // pred_fallthru
        _
    $region6: #{hgnnp_conv.4} parent=1 // loop_footer
      %s13 = sadd.s32 1, %s9
    $region7: #{hgnnp_conv.4} parent=1 // loop_footer_branch
      %8 = sbr.rel target = $region3
    $region8: #{hgnnp_conv.4} parent=1 // loop_exit
      _

</llo_original>
